<compile_context>
chip_gen: v7x
topology: tpu7x:2x2x1
jax: 0.10.0
libtpu: 0.0.40
codegen_flags: <defaults>
</compile_context>

<pallas_src>
import math

import jax
import jax.numpy as jnp
from jax.experimental import pallas as pl
from jax.experimental.pallas import tpu as pltpu

IN_DIM = 5                 # fixed by the PyTorch module
OUT_DIM = 3                # fixed by the PyTorch module
D_PAD = 8                  # input feature dim padded to a full sublane group
OUT_PAD = 128              # head output padded to a full lane (unmasked store)
MM_DTYPE = jnp.bfloat16    # MXU operand dtype; set to jnp.float32 for exact f32

_VMEM = pl.BlockSpec(memory_space=pltpu.MemorySpace.VMEM)


# ----------------------------------------------------------------------------
# Fused kernel factory
# ----------------------------------------------------------------------------
def make_fused_lstm_kernel(T, B, H, num_layers):
    """Builds the fused kernel for static (T, B, H, num_layers).

    Ref layout (must match fused_lstm_call):
      inputs : x2d (T*B, D_PAD) MM_DTYPE,
               [wih_l (Din_l, 4H) MM_DTYPE, whh_l (H, 4H) MM_DTYPE,
                b_l (1, 4H) f32] * num_layers,
               w_f (H, OUT_PAD) f32, b_f (1, OUT_PAD) f32
      outputs: o (B, OUT_PAD) f32
      scratch: zx0 (T*B, 4H) f32  -- hoisted layer-0 gate pre-activations
    Gate order matches PyTorch: [i, f, g, o].
    """
    G = 4 * H
    L = num_layers

    def kernel(*refs):
        x2d_ref = refs[0]
        layer_refs = refs[1:1 + 3 * L]
        wf_ref = refs[1 + 3 * L]
        bf_ref = refs[2 + 3 * L]
        o_ref = refs[3 + 3 * L]
        zx0_sc = refs[4 + 3 * L]

        # ---- hoisted, loop-invariant values ---------------------------------
        # Single-tanh gate activation on the lane-dense 4H axis:
        #   sigmoid lanes ([0,2H) and [3H,4H)):  sigmoid(z) = 0.5*tanh(0.5*z)+0.5
        #   tanh lane block ([2H,3H), gate "g"):  tanh(z)
        # =>  act = tanh(z * scale) * scale + offset   (one EUP op per step)
        lane = jax.lax.broadcasted_iota(jnp.int32, (B, G), 1)
        g_lane = jnp.logical_and(lane >= 2 * H, lane < 3 * H)
        scale = jnp.where(g_lane, jnp.float32(1.0), jnp.float32(0.5))
        offset = jnp.where(g_lane, jnp.float32(0.0), jnp.float32(0.5))

        # Weights loaded once; loop-invariant MXU RHS reused by every step.
        wih = [layer_refs[3 * l][...] for l in range(L)]        # MM_DTYPE
        whh = [layer_refs[3 * l + 1][...] for l in range(L)]    # MM_DTYPE
        bias = [layer_refs[3 * l + 2][...] for l in range(L)]   # f32 (1,4H)
        # Broadcast hoisted out of the unrolled loop (used by layers >= 1).
        bias_bc = [jnp.broadcast_to(bias[l], (B, G)) for l in range(L)]

        def mm(a, b):
            # bf16 (or f32) operands, f32 accumulation on the MXU.
            return jnp.dot(a.astype(MM_DTYPE), b,
                           preferred_element_type=jnp.float32)

        # ---- layer-0 input projection hoisted off the recurrence ------------
        # One (T*B, D) x (D, 4H) matmul for all timesteps; bias folded in.
        zx0_sc[...] = mm(x2d_ref[...], wih[0]) + bias[0]

        def gates(z):
            t = jnp.tanh(z * scale)          # single EUP pass per step/layer
            return t * scale + offset        # cheap VPU fixup, co-issues

        def lstm_cell(z, c_old):
            act = gates(z)
            i_g = act[:, 0 * H:1 * H]
            f_g = act[:, 1 * H:2 * H]
            g_g = act[:, 2 * H:3 * H]
            o_g = act[:, 3 * H:4 * H]
            c_new = f_g * c_old + i_g * g_g
            h_new = o_g * jnp.tanh(c_new)
            return h_new, c_new

        # ---- wavefront recurrence -------------------------------------------
        # Wavefront step s runs layer l at timestep t = s - l, so the serial
        # chain is T + L - 1 steps instead of T * L, and the per-step matmuls
        # of different layers are independent (overlap on MXU / EUP).
        # h/c live purely in registers (no scratch round-trips).
        zeros = jnp.zeros((B, H), jnp.float32)
        h = [zeros for _ in range(L)]
        c = [zeros for _ in range(L)]

        # Fully unrolled static Python loop (T + L - 1 is a small constant);
        # prologue/epilogue wavefront steps have different active layer sets.
        for s in range(T + L - 1):
            h_new = list(h)
            c_new = list(c)
            for l in range(L):
                t = s - l
                if 0 <= t < T:
                    if l == 0:
                        # hoisted input projection + recurrent matmul
                        z = zx0_sc[t * B:(t + 1) * B, :] + mm(h[0], whh[0])
                    else:
                        # h[l-1] holds layer l-1's output at timestep t
                        # (produced in wavefront step s-1); h[l] holds this
                        # layer's hidden state at timestep t-1.
                        z = (mm(h[l - 1], wih[l]) + bias_bc[l]
                             + mm(h[l], whh[l]))
                    h_new[l], c_new[l] = lstm_cell(z, c[l])
            h, c = h_new, c_new

        # ---- fused head: ReLU -> Linear(H, OUT) -> Sigmoid ------------------
        # f(output)[:, -1, :] == head applied to the last layer's hidden state
        # at the final timestep (the head is per-timestep elementwise).
        h_last = jnp.maximum(h[L - 1], jnp.float32(0.0))
        y = (jnp.dot(h_last, wf_ref[...], preferred_element_type=jnp.float32)
             + bf_ref[...])
        o_ref[...] = jax.nn.sigmoid(y)

    return kernel


def fused_lstm_call(x2d, flat_weights, T, B_pad, H, num_layers):
    kernel = make_fused_lstm_kernel(T, B_pad, H, num_layers)
    n_in = 1 + 3 * num_layers + 2
    return pl.pallas_call(
        kernel,
        out_shape=jax.ShapeDtypeStruct((B_pad, OUT_PAD), jnp.float32),
        in_specs=[_VMEM] * n_in,
        out_specs=_VMEM,
        scratch_shapes=[
            pltpu.VMEM((T * B_pad, 4 * H), jnp.float32),  # hoisted layer-0 pre-acts
        ],
    )(x2d, *flat_weights)


# ----------------------------------------------------------------------------
# Parameters (PyTorch-style init) and forward wrapper
# ----------------------------------------------------------------------------
def init_params(key, hidden_dim, num_layers):
    """PyTorch-style uniform(-1/sqrt(H), 1/sqrt(H)) init.  Weights are stored
    pre-transposed for row-major x @ W matmuls, biases pre-combined, MXU
    operands cast to MM_DTYPE, and lane-sparse dims pre-padded on the host
    (in_dim 5 -> D_PAD, head out 3 -> OUT_PAD)."""
    H = hidden_dim
    bound = 1.0 / math.sqrt(H)
    layers = []
    for layer in range(num_layers):
        d_in = IN_DIM if layer == 0 else H
        key, k1, k2, k3, k4 = jax.random.split(key, 5)
        w_ih = jax.random.uniform(k1, (4 * H, d_in), jnp.float32, -bound, bound)
        w_hh = jax.random.uniform(k2, (4 * H, H), jnp.float32, -bound, bound)
        b_ih = jax.random.uniform(k3, (4 * H,), jnp.float32, -bound, bound)
        b_hh = jax.random.uniform(k4, (4 * H,), jnp.float32, -bound, bound)
        wih_t = w_ih.T                                           # (d_in, 4H)
        if layer == 0:                                           # pad K: 5 -> 8
            wih_t = jnp.zeros((D_PAD, 4 * H), jnp.float32).at[:d_in].set(wih_t)
        layers.append((wih_t.astype(MM_DTYPE),                   # (Din, 4H)
                       w_hh.T.astype(MM_DTYPE),                  # (H, 4H)
                       (b_ih + b_hh)[None, :]))                  # (1, 4H) f32
    key, k5, k6 = jax.random.split(key, 3)
    w_f = jax.random.uniform(k5, (OUT_DIM, H), jnp.float32, -bound, bound)
    b_f = jax.random.uniform(k6, (OUT_DIM,), jnp.float32, -bound, bound)
    w_f_pad = jnp.zeros((H, OUT_PAD), jnp.float32).at[:, :OUT_DIM].set(w_f.T)
    b_f_pad = jnp.zeros((1, OUT_PAD), jnp.float32).at[:, :OUT_DIM].set(b_f[None, :])
    return {"layers": layers, "w_f": w_f_pad, "b_f": b_f_pad}


@jax.jit
def lstm_forward(x, params):
    """x: (B, T, IN_DIM) f32 -> (B, 1, OUT_DIM) f32, matching LSTM.forward."""
    B, T, D = x.shape
    layers = params["layers"]
    num_layers = len(layers)
    H = layers[0][1].shape[0]

    # Pad batch to a full f32 sublane group (>=8 rows); padded rows are
    # independent junk that never contaminates real rows (all mixing is along
    # feature dims) and are sliced off at the end.
    B_pad = max(8, ((B + 7) // 8) * 8)
    xp = jnp.zeros((B_pad, T, D_PAD), jnp.float32).at[:B, :, :D].set(x)
    # Time-major (T*B_pad, D_PAD) so the whole layer-0 input projection is one
    # matmul inside the kernel; cast to the MXU operand dtype.
    x2d = jnp.transpose(xp, (1, 0, 2)).reshape(T * B_pad, D_PAD).astype(MM_DTYPE)

    flat = []
    for (wih_t, whh_t, b) in layers:
        flat.extend([wih_t, whh_t, b])
    flat.extend([params["w_f"], params["b_f"]])

    y = fused_lstm_call(x2d, flat, T, B_pad, H, num_layers)  # (B_pad, OUT_PAD)
    return y[:B, None, :OUT_DIM]                              # (B, 1, OUT_DIM)


# ----------------------------------------------------------------------------
# Pure-JAX reference (same rounded weights, f32 math) for a correctness check
# ----------------------------------------------------------------------------
def lstm_reference(x, params):
    B, T, D = x.shape
    layers = params["layers"]
    H = layers[0][1].shape[0]
    seq = jnp.zeros((B, T, D_PAD), jnp.float32).at[:, :, :D].set(x)
    for (wih_t, whh_t, b) in layers:
        wih = wih_t.astype(jnp.float32)
        whh = whh_t.astype(jnp.float32)
        h = jnp.zeros((B, H), jnp.float32)
        c = jnp.zeros((B, H), jnp.float32)
        outs = []
        for t in range(T):
            z = seq[:, t, :] @ wih + h @ whh + b
            i = jax.nn.sigmoid(z[:, 0 * H:1 * H])
            f = jax.nn.sigmoid(z[:, 1 * H:2 * H])
            g = jnp.tanh(z[:, 2 * H:3 * H])
            o = jax.nn.sigmoid(z[:, 3 * H:4 * H])
            c = f * c + i * g
            h = o * jnp.tanh(c)
            outs.append(h)
        seq = jnp.stack(outs, axis=1)
    y = jnp.maximum(seq[:, -1, :], 0.0) @ params["w_f"] + params["b_f"]
    return jax.nn.sigmoid(y)[:, None, :OUT_DIM]


if __name__ == "__main__":
    B, T = 2, 8
    HIDDEN_DIM, NUM_LAYERS = 32, 2

    key = jax.random.PRNGKey(0)
    key_p, key_x = jax.random.split(key)
    params = init_params(key_p, HIDDEN_DIM, NUM_LAYERS)
    x = jax.random.normal(key_x, (B, T, IN_DIM), jnp.float32)

    y = lstm_forward(x, params)
    jax.block_until_ready(y)
    assert y.shape == (B, 1, OUT_DIM), y.shape
    assert bool(jnp.all(jnp.isfinite(y)))

    # Correctness check vs f32 reference (loose tol: bf16 MXU operands).
    y_ref = lstm_reference(x, params)
    err = float(jnp.max(jnp.abs(y - y_ref)))
    assert err < 5e-2, f"max abs err vs reference: {err}"

    print("KERNEL_OK")
</pallas_src>

<mosaic_0001>
module attributes {stable_mosaic.version = 11 : i64} {
  func.func @kernel(%arg0: memref<64x8xbf16, #tpu.memory_space<vmem>>, %arg1: memref<8x128xbf16, #tpu.memory_space<vmem>>, %arg2: memref<32x128xbf16, #tpu.memory_space<vmem>>, %arg3: memref<1x128xf32, #tpu.memory_space<vmem>>, %arg4: memref<32x128xbf16, #tpu.memory_space<vmem>>, %arg5: memref<32x128xbf16, #tpu.memory_space<vmem>>, %arg6: memref<1x128xf32, #tpu.memory_space<vmem>>, %arg7: memref<32x128xf32, #tpu.memory_space<vmem>>, %arg8: memref<1x128xf32, #tpu.memory_space<vmem>>, %arg9: memref<8x128xf32, #tpu.memory_space<vmem>>, %arg10: memref<64x128xf32, #tpu.memory_space<vmem>>) attributes {dimension_semantics = [], scalar_prefetch = 0 : i64, scratch_operands = 1 : i64, tpu.core_type = #tpu.core_type<tc>} {
    %0 = tpu.iota {dimensions = array<i32: 1>} : vector<8x128xi32>
    %c64_i32 = arith.constant 64 : i32
    %1 = vector.broadcast %c64_i32 : i32 to vector<8x128xi32>
    %2 = arith.cmpi sge, %0, %1 : vector<8x128xi32>
    %c96_i32 = arith.constant 96 : i32
    %3 = vector.broadcast %c96_i32 : i32 to vector<8x128xi32>
    %4 = arith.cmpi slt, %0, %3 : vector<8x128xi32>
    %5 = arith.andi %2, %4 : vector<8x128xi1>
    %cst = arith.constant 1.000000e+00 : f32
    %cst_0 = arith.constant 5.000000e-01 : f32
    %6 = vector.broadcast %cst : f32 to vector<8x128xf32>
    %7 = vector.broadcast %cst_0 : f32 to vector<8x128xf32>
    %8 = arith.select %5, %6, %7 : vector<8x128xi1>, vector<8x128xf32>
    %cst_1 = arith.constant 0.000000e+00 : f32
    %cst_2 = arith.constant 5.000000e-01 : f32
    %9 = vector.broadcast %cst_1 : f32 to vector<8x128xf32>
    %10 = vector.broadcast %cst_2 : f32 to vector<8x128xf32>
    %11 = arith.select %5, %9, %10 : vector<8x128xi1>, vector<8x128xf32>
    %c0 = arith.constant 0 : index
    %c0_3 = arith.constant 0 : index
    %12 = vector.load %arg1[%c0, %c0_3] : memref<8x128xbf16, #tpu.memory_space<vmem>>, vector<8x128xbf16>
    %c0_4 = arith.constant 0 : index
    %c0_5 = arith.constant 0 : index
    %13 = vector.load %arg4[%c0_4, %c0_5] : memref<32x128xbf16, #tpu.memory_space<vmem>>, vector<32x128xbf16>
    %c0_6 = arith.constant 0 : index
    %c0_7 = arith.constant 0 : index
    %14 = vector.load %arg2[%c0_6, %c0_7] : memref<32x128xbf16, #tpu.memory_space<vmem>>, vector<32x128xbf16>
    %c0_8 = arith.constant 0 : index
    %c0_9 = arith.constant 0 : index
    %15 = vector.load %arg5[%c0_8, %c0_9] : memref<32x128xbf16, #tpu.memory_space<vmem>>, vector<32x128xbf16>
    %c0_10 = arith.constant 0 : index
    %c0_11 = arith.constant 0 : index
    %16 = vector.load %arg3[%c0_10, %c0_11] : memref<1x128xf32, #tpu.memory_space<vmem>>, vector<1x128xf32>
    %c0_12 = arith.constant 0 : index
    %c0_13 = arith.constant 0 : index
    %17 = vector.load %arg6[%c0_12, %c0_13] : memref<1x128xf32, #tpu.memory_space<vmem>>, vector<1x128xf32>
    %18 = vector.shape_cast %17 : vector<1x128xf32> to vector<1x128xf32>
    %19 = vector.broadcast %18 : vector<1x128xf32> to vector<8x128xf32>
    %c0_14 = arith.constant 0 : index
    %c0_15 = arith.constant 0 : index
    %20 = vector.load %arg0[%c0_14, %c0_15] : memref<64x8xbf16, #tpu.memory_space<vmem>>, vector<64x8xbf16>
    %cst_16 = arith.constant dense<0.000000e+00> : vector<64x128xf32>
    %21 = tpu.matmul %20, %12, %cst_16 {dimension_numbers = #tpu.dot_dimension_numbers<[1], [0], [0], [1], [0, 0, 1, 1], [], []>} : vector<64x8xbf16>, vector<8x128xbf16>, vector<64x128xf32> -> vector<64x128xf32>
    %22 = vector.broadcast %16 : vector<1x128xf32> to vector<64x128xf32>
    %23 = arith.addf %21, %22 : vector<64x128xf32>
    %c0_17 = arith.constant 0 : index
    %c0_18 = arith.constant 0 : index
    %24 = vector.load %arg10[%c0_17, %c0_18] : memref<64x128xf32, #tpu.memory_space<vmem>>, vector<64x128xf32>
    tpu.vector_store %arg10[%c0_17, %c0_18], %23 {strides = array<i32>} : memref<64x128xf32, #tpu.memory_space<vmem>>, vector<64x128xf32>,
    %cst_19 = arith.constant 0.000000e+00 : f32
    %25 = vector.broadcast %cst_19 : f32 to vector<8x32xf32>
    %c0_20 = arith.constant 0 : index
    %c0_21 = arith.constant 0 : index
    %26 = vector.load %arg10[%c0_20, %c0_21] : memref<64x128xf32, #tpu.memory_space<vmem>>, vector<8x128xf32>
    %27 = arith.truncf %25 : vector<8x32xf32> to vector<8x32xbf16>
    %cst_22 = arith.constant dense<0.000000e+00> : vector<8x128xf32>
    %28 = tpu.matmul %27, %14, %cst_22 {dimension_numbers = #tpu.dot_dimension_numbers<[1], [0], [0], [1], [0, 0, 1, 1], [], []>} : vector<8x32xbf16>, vector<32x128xbf16>, vector<8x128xf32> -> vector<8x128xf32>
    %29 = arith.addf %26, %28 : vector<8x128xf32>
    %30 = arith.mulf %29, %8 : vector<8x128xf32>
    %31 = math.tanh %30 : vector<8x128xf32>
    %32 = arith.mulf %31, %8 : vector<8x128xf32>
    %33 = arith.addf %32, %11 : vector<8x128xf32>
    %34 = vector.extract_strided_slice %33 {offsets = [0, 0], sizes = [8, 32], strides = [1, 1]} : vector<8x128xf32> to vector<8x32xf32>
    %35 = vector.extract_strided_slice %33 {offsets = [0, 32], sizes = [8, 32], strides = [1, 1]} : vector<8x128xf32> to vector<8x32xf32>
    %36 = vector.extract_strided_slice %33 {offsets = [0, 64], sizes = [8, 32], strides = [1, 1]} : vector<8x128xf32> to vector<8x32xf32>
    %37 = vector.extract_strided_slice %33 {offsets = [0, 96], sizes = [8, 32], strides = [1, 1]} : vector<8x128xf32> to vector<8x32xf32>
    %38 = arith.mulf %35, %25 : vector<8x32xf32>
    %39 = arith.mulf %34, %36 : vector<8x32xf32>
    %40 = arith.addf %38, %39 : vector<8x32xf32>
    %41 = math.tanh %40 : vector<8x32xf32>
    %42 = arith.mulf %37, %41 : vector<8x32xf32>
    %c8 = arith.constant 8 : index
    %c0_23 = arith.constant 0 : index
    %43 = vector.load %arg10[%c8, %c0_23] : memref<64x128xf32, #tpu.memory_space<vmem>>, vector<8x128xf32>
    %44 = arith.truncf %42 : vector<8x32xf32> to vector<8x32xbf16>
    %cst_24 = arith.constant dense<0.000000e+00> : vector<8x128xf32>
    %45 = tpu.matmul %44, %14, %cst_24 {dimension_numbers = #tpu.dot_dimension_numbers<[1], [0], [0], [1], [0, 0, 1, 1], [], []>} : vector<8x32xbf16>, vector<32x128xbf16>, vector<8x128xf32> -> vector<8x128xf32>
    %46 = arith.addf %43, %45 : vector<8x128xf32>
    %47 = arith.mulf %46, %8 : vector<8x128xf32>
    %48 = math.tanh %47 : vector<8x128xf32>
    %49 = arith.mulf %48, %8 : vector<8x128xf32>
    %50 = arith.addf %49, %11 : vector<8x128xf32>
    %51 = vector.extract_strided_slice %50 {offsets = [0, 0], sizes = [8, 32], strides = [1, 1]} : vector<8x128xf32> to vector<8x32xf32>
    %52 = vector.extract_strided_slice %50 {offsets = [0, 32], sizes = [8, 32], strides = [1, 1]} : vector<8x128xf32> to vector<8x32xf32>
    %53 = vector.extract_strided_slice %50 {offsets = [0, 64], sizes = [8, 32], strides = [1, 1]} : vector<8x128xf32> to vector<8x32xf32>
    %54 = vector.extract_strided_slice %50 {offsets = [0, 96], sizes = [8, 32], strides = [1, 1]} : vector<8x128xf32> to vector<8x32xf32>
    %55 = arith.mulf %52, %40 : vector<8x32xf32>
    %56 = arith.mulf %51, %53 : vector<8x32xf32>
    %57 = arith.addf %55, %56 : vector<8x32xf32>
    %58 = math.tanh %57 : vector<8x32xf32>
    %59 = arith.mulf %54, %58 : vector<8x32xf32>
    %60 = arith.truncf %42 : vector<8x32xf32> to vector<8x32xbf16>
    %cst_25 = arith.constant dense<0.000000e+00> : vector<8x128xf32>
    %61 = tpu.matmul %60, %13, %cst_25 {dimension_numbers = #tpu.dot_dimension_numbers<[1], [0], [0], [1], [0, 0, 1, 1], [], []>} : vector<8x32xbf16>, vector<32x128xbf16>, vector<8x128xf32> -> vector<8x128xf32>
    %62 = arith.addf %61, %19 : vector<8x128xf32>
    %63 = arith.truncf %25 : vector<8x32xf32> to vector<8x32xbf16>
    %cst_26 = arith.constant dense<0.000000e+00> : vector<8x128xf32>
    %64 = tpu.matmul %63, %15, %cst_26 {dimension_numbers = #tpu.dot_dimension_numbers<[1], [0], [0], [1], [0, 0, 1, 1], [], []>} : vector<8x32xbf16>, vector<32x128xbf16>, vector<8x128xf32> -> vector<8x128xf32>
    %65 = arith.addf %62, %64 : vector<8x128xf32>
    %66 = arith.mulf %65, %8 : vector<8x128xf32>
    %67 = math.tanh %66 : vector<8x128xf32>
    %68 = arith.mulf %67, %8 : vector<8x128xf32>
    %69 = arith.addf %68, %11 : vector<8x128xf32>
    %70 = vector.extract_strided_slice %69 {offsets = [0, 0], sizes = [8, 32], strides = [1, 1]} : vector<8x128xf32> to vector<8x32xf32>
    %71 = vector.extract_strided_slice %69 {offsets = [0, 32], sizes = [8, 32], strides = [1, 1]} : vector<8x128xf32> to vector<8x32xf32>
    %72 = vector.extract_strided_slice %69 {offsets = [0, 64], sizes = [8, 32], strides = [1, 1]} : vector<8x128xf32> to vector<8x32xf32>
    %73 = vector.extract_strided_slice %69 {offsets = [0, 96], sizes = [8, 32], strides = [1, 1]} : vector<8x128xf32> to vector<8x32xf32>
    %74 = arith.mulf %71, %25 : vector<8x32xf32>
    %75 = arith.mulf %70, %72 : vector<8x32xf32>
    %76 = arith.addf %74, %75 : vector<8x32xf32>
    %77 = math.tanh %76 : vector<8x32xf32>
    %78 = arith.mulf %73, %77 : vector<8x32xf32>
    %c16 = arith.constant 16 : index
    %c0_27 = arith.constant 0 : index
    %79 = vector.load %arg10[%c16, %c0_27] : memref<64x128xf32, #tpu.memory_space<vmem>>, vector<8x128xf32>
    %80 = arith.truncf %59 : vector<8x32xf32> to vector<8x32xbf16>
    %cst_28 = arith.constant dense<0.000000e+00> : vector<8x128xf32>
    %81 = tpu.matmul %80, %14, %cst_28 {dimension_numbers = #tpu.dot_dimension_numbers<[1], [0], [0], [1], [0, 0, 1, 1], [], []>} : vector<8x32xbf16>, vector<32x128xbf16>, vector<8x128xf32> -> vector<8x128xf32>
    %82 = arith.addf %79, %81 : vector<8x128xf32>
    %83 = arith.mulf %82, %8 : vector<8x128xf32>
    %84 = math.tanh %83 : vector<8x128xf32>
    %85 = arith.mulf %84, %8 : vector<8x128xf32>
    %86 = arith.addf %85, %11 : vector<8x128xf32>
    %87 = vector.extract_strided_slice %86 {offsets = [0, 0], sizes = [8, 32], strides = [1, 1]} : vector<8x128xf32> to vector<8x32xf32>
    %88 = vector.extract_strided_slice %86 {offsets = [0, 32], sizes = [8, 32], strides = [1, 1]} : vector<8x128xf32> to vector<8x32xf32>
    %89 = vector.extract_strided_slice %86 {offsets = [0, 64], sizes = [8, 32], strides = [1, 1]} : vector<8x128xf32> to vector<8x32xf32>
    %90 = vector.extract_strided_slice %86 {offsets = [0, 96], sizes = [8, 32], strides = [1, 1]} : vector<8x128xf32> to vector<8x32xf32>
    %91 = arith.mulf %88, %57 : vector<8x32xf32>
    %92 = arith.mulf %87, %89 : vector<8x32xf32>
    %93 = arith.addf %91, %92 : vector<8x32xf32>
    %94 = math.tanh %93 : vector<8x32xf32>
    %95 = arith.mulf %90, %94 : vector<8x32xf32>
    %96 = arith.truncf %59 : vector<8x32xf32> to vector<8x32xbf16>
    %cst_29 = arith.constant dense<0.000000e+00> : vector<8x128xf32>
    %97 = tpu.matmul %96, %13, %cst_29 {dimension_numbers = #tpu.dot_dimension_numbers<[1], [0], [0], [1], [0, 0, 1, 1], [], []>} : vector<8x32xbf16>, vector<32x128xbf16>, vector<8x128xf32> -> vector<8x128xf32>
    %98 = arith.addf %97, %19 : vector<8x128xf32>
    %99 = arith.truncf %78 : vector<8x32xf32> to vector<8x32xbf16>
    %cst_30 = arith.constant dense<0.000000e+00> : vector<8x128xf32>
    %100 = tpu.matmul %99, %15, %cst_30 {dimension_numbers = #tpu.dot_dimension_numbers<[1], [0], [0], [1], [0, 0, 1, 1], [], []>} : vector<8x32xbf16>, vector<32x128xbf16>, vector<8x128xf32> -> vector<8x128xf32>
    %101 = arith.addf %98, %100 : vector<8x128xf32>
    %102 = arith.mulf %101, %8 : vector<8x128xf32>
    %103 = math.tanh %102 : vector<8x128xf32>
    %104 = arith.mulf %103, %8 : vector<8x128xf32>
    %105 = arith.addf %104, %11 : vector<8x128xf32>
    %106 = vector.extract_strided_slice %105 {offsets = [0, 0], sizes = [8, 32], strides = [1, 1]} : vector<8x128xf32> to vector<8x32xf32>
    %107 = vector.extract_strided_slice %105 {offsets = [0, 32], sizes = [8, 32], strides = [1, 1]} : vector<8x128xf32> to vector<8x32xf32>
    %108 = vector.extract_strided_slice %105 {offsets = [0, 64], sizes = [8, 32], strides = [1, 1]} : vector<8x128xf32> to vector<8x32xf32>
    %109 = vector.extract_strided_slice %105 {offsets = [0, 96], sizes = [8, 32], strides = [1, 1]} : vector<8x128xf32> to vector<8x32xf32>
    %110 = arith.mulf %107, %76 : vector<8x32xf32>
    %111 = arith.mulf %106, %108 : vector<8x32xf32>
    %112 = arith.addf %110, %111 : vector<8x32xf32>
    %113 = math.tanh %112 : vector<8x32xf32>
    %114 = arith.mulf %109, %113 : vector<8x32xf32>
    %c24 = arith.constant 24 : index
    %c0_31 = arith.constant 0 : index
    %115 = vector.load %arg10[%c24, %c0_31] : memref<64x128xf32, #tpu.memory_space<vmem>>, vector<8x128xf32>
    %116 = arith.truncf %95 : vector<8x32xf32> to vector<8x32xbf16>
    %cst_32 = arith.constant dense<0.000000e+00> : vector<8x128xf32>
    %117 = tpu.matmul %116, %14, %cst_32 {dimension_numbers = #tpu.dot_dimension_numbers<[1], [0], [0], [1], [0, 0, 1, 1], [], []>} : vector<8x32xbf16>, vector<32x128xbf16>, vector<8x128xf32> -> vector<8x128xf32>
    %118 = arith.addf %115, %117 : vector<8x128xf32>
    %119 = arith.mulf %118, %8 : vector<8x128xf32>
    %120 = math.tanh %119 : vector<8x128xf32>
    %121 = arith.mulf %120, %8 : vector<8x128xf32>
    %122 = arith.addf %121, %11 : vector<8x128xf32>
    %123 = vector.extract_strided_slice %122 {offsets = [0, 0], sizes = [8, 32], strides = [1, 1]} : vector<8x128xf32> to vector<8x32xf32>
    %124 = vector.extract_strided_slice %122 {offsets = [0, 32], sizes = [8, 32], strides = [1, 1]} : vector<8x128xf32> to vector<8x32xf32>
    %125 = vector.extract_strided_slice %122 {offsets = [0, 64], sizes = [8, 32], strides = [1, 1]} : vector<8x128xf32> to vector<8x32xf32>
    %126 = vector.extract_strided_slice %122 {offsets = [0, 96], sizes = [8, 32], strides = [1, 1]} : vector<8x128xf32> to vector<8x32xf32>
    %127 = arith.mulf %124, %93 : vector<8x32xf32>
    %128 = arith.mulf %123, %125 : vector<8x32xf32>
    %129 = arith.addf %127, %128 : vector<8x32xf32>
    %130 = math.tanh %129 : vector<8x32xf32>
    %131 = arith.mulf %126, %130 : vector<8x32xf32>
    %132 = arith.truncf %95 : vector<8x32xf32> to vector<8x32xbf16>
    %cst_33 = arith.constant dense<0.000000e+00> : vector<8x128xf32>
    %133 = tpu.matmul %132, %13, %cst_33 {dimension_numbers = #tpu.dot_dimension_numbers<[1], [0], [0], [1], [0, 0, 1, 1], [], []>} : vector<8x32xbf16>, vector<32x128xbf16>, vector<8x128xf32> -> vector<8x128xf32>
    %134 = arith.addf %133, %19 : vector<8x128xf32>
    %135 = arith.truncf %114 : vector<8x32xf32> to vector<8x32xbf16>
    %cst_34 = arith.constant dense<0.000000e+00> : vector<8x128xf32>
    %136 = tpu.matmul %135, %15, %cst_34 {dimension_numbers = #tpu.dot_dimension_numbers<[1], [0], [0], [1], [0, 0, 1, 1], [], []>} : vector<8x32xbf16>, vector<32x128xbf16>, vector<8x128xf32> -> vector<8x128xf32>
    %137 = arith.addf %134, %136 : vector<8x128xf32>
    %138 = arith.mulf %137, %8 : vector<8x128xf32>
    %139 = math.tanh %138 : vector<8x128xf32>
    %140 = arith.mulf %139, %8 : vector<8x128xf32>
    %141 = arith.addf %140, %11 : vector<8x128xf32>
    %142 = vector.extract_strided_slice %141 {offsets = [0, 0], sizes = [8, 32], strides = [1, 1]} : vector<8x128xf32> to vector<8x32xf32>
    %143 = vector.extract_strided_slice %141 {offsets = [0, 32], sizes = [8, 32], strides = [1, 1]} : vector<8x128xf32> to vector<8x32xf32>
    %144 = vector.extract_strided_slice %141 {offsets = [0, 64], sizes = [8, 32], strides = [1, 1]} : vector<8x128xf32> to vector<8x32xf32>
    %145 = vector.extract_strided_slice %141 {offsets = [0, 96], sizes = [8, 32], strides = [1, 1]} : vector<8x128xf32> to vector<8x32xf32>
    %146 = arith.mulf %143, %112 : vector<8x32xf32>
    %147 = arith.mulf %142, %144 : vector<8x32xf32>
    %148 = arith.addf %146, %147 : vector<8x32xf32>
    %149 = math.tanh %148 : vector<8x32xf32>
    %150 = arith.mulf %145, %149 : vector<8x32xf32>
    %c32 = arith.constant 32 : index
    %c0_35 = arith.constant 0 : index
    %151 = vector.load %arg10[%c32, %c0_35] : memref<64x128xf32, #tpu.memory_space<vmem>>, vector<8x128xf32>
    %152 = arith.truncf %131 : vector<8x32xf32> to vector<8x32xbf16>
    %cst_36 = arith.constant dense<0.000000e+00> : vector<8x128xf32>
    %153 = tpu.matmul %152, %14, %cst_36 {dimension_numbers = #tpu.dot_dimension_numbers<[1], [0], [0], [1], [0, 0, 1, 1], [], []>} : vector<8x32xbf16>, vector<32x128xbf16>, vector<8x128xf32> -> vector<8x128xf32>
    %154 = arith.addf %151, %153 : vector<8x128xf32>
    %155 = arith.mulf %154, %8 : vector<8x128xf32>
    %156 = math.tanh %155 : vector<8x128xf32>
    %157 = arith.mulf %156, %8 : vector<8x128xf32>
    %158 = arith.addf %157, %11 : vector<8x128xf32>
    %159 = vector.extract_strided_slice %158 {offsets = [0, 0], sizes = [8, 32], strides = [1, 1]} : vector<8x128xf32> to vector<8x32xf32>
    %160 = vector.extract_strided_slice %158 {offsets = [0, 32], sizes = [8, 32], strides = [1, 1]} : vector<8x128xf32> to vector<8x32xf32>
    %161 = vector.extract_strided_slice %158 {offsets = [0, 64], sizes = [8, 32], strides = [1, 1]} : vector<8x128xf32> to vector<8x32xf32>
    %162 = vector.extract_strided_slice %158 {offsets = [0, 96], sizes = [8, 32], strides = [1, 1]} : vector<8x128xf32> to vector<8x32xf32>
    %163 = arith.mulf %160, %129 : vector<8x32xf32>
    %164 = arith.mulf %159, %161 : vector<8x32xf32>
    %165 = arith.addf %163, %164 : vector<8x32xf32>
    %166 = math.tanh %165 : vector<8x32xf32>
    %167 = arith.mulf %162, %166 : vector<8x32xf32>
    %168 = arith.truncf %131 : vector<8x32xf32> to vector<8x32xbf16>
    %cst_37 = arith.constant dense<0.000000e+00> : vector<8x128xf32>
    %169 = tpu.matmul %168, %13, %cst_37 {dimension_numbers = #tpu.dot_dimension_numbers<[1], [0], [0], [1], [0, 0, 1, 1], [], []>} : vector<8x32xbf16>, vector<32x128xbf16>, vector<8x128xf32> -> vector<8x128xf32>
    %170 = arith.addf %169, %19 : vector<8x128xf32>
    %171 = arith.truncf %150 : vector<8x32xf32> to vector<8x32xbf16>
    %cst_38 = arith.constant dense<0.000000e+00> : vector<8x128xf32>
    %172 = tpu.matmul %171, %15, %cst_38 {dimension_numbers = #tpu.dot_dimension_numbers<[1], [0], [0], [1], [0, 0, 1, 1], [], []>} : vector<8x32xbf16>, vector<32x128xbf16>, vector<8x128xf32> -> vector<8x128xf32>
    %173 = arith.addf %170, %172 : vector<8x128xf32>
    %174 = arith.mulf %173, %8 : vector<8x128xf32>
    %175 = math.tanh %174 : vector<8x128xf32>
    %176 = arith.mulf %175, %8 : vector<8x128xf32>
    %177 = arith.addf %176, %11 : vector<8x128xf32>
    %178 = vector.extract_strided_slice %177 {offsets = [0, 0], sizes = [8, 32], strides = [1, 1]} : vector<8x128xf32> to vector<8x32xf32>
    %179 = vector.extract_strided_slice %177 {offsets = [0, 32], sizes = [8, 32], strides = [1, 1]} : vector<8x128xf32> to vector<8x32xf32>
    %180 = vector.extract_strided_slice %177 {offsets = [0, 64], sizes = [8, 32], strides = [1, 1]} : vector<8x128xf32> to vector<8x32xf32>
    %181 = vector.extract_strided_slice %177 {offsets = [0, 96], sizes = [8, 32], strides = [1, 1]} : vector<8x128xf32> to vector<8x32xf32>
    %182 = arith.mulf %179, %148 : vector<8x32xf32>
    %183 = arith.mulf %178, %180 : vector<8x32xf32>
    %184 = arith.addf %182, %183 : vector<8x32xf32>
    %185 = math.tanh %184 : vector<8x32xf32>
    %186 = arith.mulf %181, %185 : vector<8x32xf32>
    %c40 = arith.constant 40 : index
    %c0_39 = arith.constant 0 : index
    %187 = vector.load %arg10[%c40, %c0_39] : memref<64x128xf32, #tpu.memory_space<vmem>>, vector<8x128xf32>
    %188 = arith.truncf %167 : vector<8x32xf32> to vector<8x32xbf16>
    %cst_40 = arith.constant dense<0.000000e+00> : vector<8x128xf32>
    %189 = tpu.matmul %188, %14, %cst_40 {dimension_numbers = #tpu.dot_dimension_numbers<[1], [0], [0], [1], [0, 0, 1, 1], [], []>} : vector<8x32xbf16>, vector<32x128xbf16>, vector<8x128xf32> -> vector<8x128xf32>
    %190 = arith.addf %187, %189 : vector<8x128xf32>
    %191 = arith.mulf %190, %8 : vector<8x128xf32>
    %192 = math.tanh %191 : vector<8x128xf32>
    %193 = arith.mulf %192, %8 : vector<8x128xf32>
    %194 = arith.addf %193, %11 : vector<8x128xf32>
    %195 = vector.extract_strided_slice %194 {offsets = [0, 0], sizes = [8, 32], strides = [1, 1]} : vector<8x128xf32> to vector<8x32xf32>
    %196 = vector.extract_strided_slice %194 {offsets = [0, 32], sizes = [8, 32], strides = [1, 1]} : vector<8x128xf32> to vector<8x32xf32>
    %197 = vector.extract_strided_slice %194 {offsets = [0, 64], sizes = [8, 32], strides = [1, 1]} : vector<8x128xf32> to vector<8x32xf32>
    %198 = vector.extract_strided_slice %194 {offsets = [0, 96], sizes = [8, 32], strides = [1, 1]} : vector<8x128xf32> to vector<8x32xf32>
    %199 = arith.mulf %196, %165 : vector<8x32xf32>
    %200 = arith.mulf %195, %197 : vector<8x32xf32>
    %201 = arith.addf %199, %200 : vector<8x32xf32>
    %202 = math.tanh %201 : vector<8x32xf32>
    %203 = arith.mulf %198, %202 : vector<8x32xf32>
    %204 = arith.truncf %167 : vector<8x32xf32> to vector<8x32xbf16>
    %cst_41 = arith.constant dense<0.000000e+00> : vector<8x128xf32>
    %205 = tpu.matmul %204, %13, %cst_41 {dimension_numbers = #tpu.dot_dimension_numbers<[1], [0], [0], [1], [0, 0, 1, 1], [], []>} : vector<8x32xbf16>, vector<32x128xbf16>, vector<8x128xf32> -> vector<8x128xf32>
    %206 = arith.addf %205, %19 : vector<8x128xf32>
    %207 = arith.truncf %186 : vector<8x32xf32> to vector<8x32xbf16>
    %cst_42 = arith.constant dense<0.000000e+00> : vector<8x128xf32>
    %208 = tpu.matmul %207, %15, %cst_42 {dimension_numbers = #tpu.dot_dimension_numbers<[1], [0], [0], [1], [0, 0, 1, 1], [], []>} : vector<8x32xbf16>, vector<32x128xbf16>, vector<8x128xf32> -> vector<8x128xf32>
    %209 = arith.addf %206, %208 : vector<8x128xf32>
    %210 = arith.mulf %209, %8 : vector<8x128xf32>
    %211 = math.tanh %210 : vector<8x128xf32>
    %212 = arith.mulf %211, %8 : vector<8x128xf32>
    %213 = arith.addf %212, %11 : vector<8x128xf32>
    %214 = vector.extract_strided_slice %213 {offsets = [0, 0], sizes = [8, 32], strides = [1, 1]} : vector<8x128xf32> to vector<8x32xf32>
    %215 = vector.extract_strided_slice %213 {offsets = [0, 32], sizes = [8, 32], strides = [1, 1]} : vector<8x128xf32> to vector<8x32xf32>
    %216 = vector.extract_strided_slice %213 {offsets = [0, 64], sizes = [8, 32], strides = [1, 1]} : vector<8x128xf32> to vector<8x32xf32>
    %217 = vector.extract_strided_slice %213 {offsets = [0, 96], sizes = [8, 32], strides = [1, 1]} : vector<8x128xf32> to vector<8x32xf32>
    %218 = arith.mulf %215, %184 : vector<8x32xf32>
    %219 = arith.mulf %214, %216 : vector<8x32xf32>
    %220 = arith.addf %218, %219 : vector<8x32xf32>
    %221 = math.tanh %220 : vector<8x32xf32>
    %222 = arith.mulf %217, %221 : vector<8x32xf32>
    %c48 = arith.constant 48 : index
    %c0_43 = arith.constant 0 : index
    %223 = vector.load %arg10[%c48, %c0_43] : memref<64x128xf32, #tpu.memory_space<vmem>>, vector<8x128xf32>
    %224 = arith.truncf %203 : vector<8x32xf32> to vector<8x32xbf16>
    %cst_44 = arith.constant dense<0.000000e+00> : vector<8x128xf32>
    %225 = tpu.matmul %224, %14, %cst_44 {dimension_numbers = #tpu.dot_dimension_numbers<[1], [0], [0], [1], [0, 0, 1, 1], [], []>} : vector<8x32xbf16>, vector<32x128xbf16>, vector<8x128xf32> -> vector<8x128xf32>
    %226 = arith.addf %223, %225 : vector<8x128xf32>
    %227 = arith.mulf %226, %8 : vector<8x128xf32>
    %228 = math.tanh %227 : vector<8x128xf32>
    %229 = arith.mulf %228, %8 : vector<8x128xf32>
    %230 = arith.addf %229, %11 : vector<8x128xf32>
    %231 = vector.extract_strided_slice %230 {offsets = [0, 0], sizes = [8, 32], strides = [1, 1]} : vector<8x128xf32> to vector<8x32xf32>
    %232 = vector.extract_strided_slice %230 {offsets = [0, 32], sizes = [8, 32], strides = [1, 1]} : vector<8x128xf32> to vector<8x32xf32>
    %233 = vector.extract_strided_slice %230 {offsets = [0, 64], sizes = [8, 32], strides = [1, 1]} : vector<8x128xf32> to vector<8x32xf32>
    %234 = vector.extract_strided_slice %230 {offsets = [0, 96], sizes = [8, 32], strides = [1, 1]} : vector<8x128xf32> to vector<8x32xf32>
    %235 = arith.mulf %232, %201 : vector<8x32xf32>
    %236 = arith.mulf %231, %233 : vector<8x32xf32>
    %237 = arith.addf %235, %236 : vector<8x32xf32>
    %238 = math.tanh %237 : vector<8x32xf32>
    %239 = arith.mulf %234, %238 : vector<8x32xf32>
    %240 = arith.truncf %203 : vector<8x32xf32> to vector<8x32xbf16>
    %cst_45 = arith.constant dense<0.000000e+00> : vector<8x128xf32>
    %241 = tpu.matmul %240, %13, %cst_45 {dimension_numbers = #tpu.dot_dimension_numbers<[1], [0], [0], [1], [0, 0, 1, 1], [], []>} : vector<8x32xbf16>, vector<32x128xbf16>, vector<8x128xf32> -> vector<8x128xf32>
    %242 = arith.addf %241, %19 : vector<8x128xf32>
    %243 = arith.truncf %222 : vector<8x32xf32> to vector<8x32xbf16>
    %cst_46 = arith.constant dense<0.000000e+00> : vector<8x128xf32>
    %244 = tpu.matmul %243, %15, %cst_46 {dimension_numbers = #tpu.dot_dimension_numbers<[1], [0], [0], [1], [0, 0, 1, 1], [], []>} : vector<8x32xbf16>, vector<32x128xbf16>, vector<8x128xf32> -> vector<8x128xf32>
    %245 = arith.addf %242, %244 : vector<8x128xf32>
    %246 = arith.mulf %245, %8 : vector<8x128xf32>
    %247 = math.tanh %246 : vector<8x128xf32>
    %248 = arith.mulf %247, %8 : vector<8x128xf32>
    %249 = arith.addf %248, %11 : vector<8x128xf32>
    %250 = vector.extract_strided_slice %249 {offsets = [0, 0], sizes = [8, 32], strides = [1, 1]} : vector<8x128xf32> to vector<8x32xf32>
    %251 = vector.extract_strided_slice %249 {offsets = [0, 32], sizes = [8, 32], strides = [1, 1]} : vector<8x128xf32> to vector<8x32xf32>
    %252 = vector.extract_strided_slice %249 {offsets = [0, 64], sizes = [8, 32], strides = [1, 1]} : vector<8x128xf32> to vector<8x32xf32>
    %253 = vector.extract_strided_slice %249 {offsets = [0, 96], sizes = [8, 32], strides = [1, 1]} : vector<8x128xf32> to vector<8x32xf32>
    %254 = arith.mulf %251, %220 : vector<8x32xf32>
    %255 = arith.mulf %250, %252 : vector<8x32xf32>
    %256 = arith.addf %254, %255 : vector<8x32xf32>
    %257 = math.tanh %256 : vector<8x32xf32>
    %258 = arith.mulf %253, %257 : vector<8x32xf32>
    %c56 = arith.constant 56 : index
    %c0_47 = arith.constant 0 : index
    %259 = vector.load %arg10[%c56, %c0_47] : memref<64x128xf32, #tpu.memory_space<vmem>>, vector<8x128xf32>
    %260 = arith.truncf %239 : vector<8x32xf32> to vector<8x32xbf16>
    %cst_48 = arith.constant dense<0.000000e+00> : vector<8x128xf32>
    %261 = tpu.matmul %260, %14, %cst_48 {dimension_numbers = #tpu.dot_dimension_numbers<[1], [0], [0], [1], [0, 0, 1, 1], [], []>} : vector<8x32xbf16>, vector<32x128xbf16>, vector<8x128xf32> -> vector<8x128xf32>
    %262 = arith.addf %259, %261 : vector<8x128xf32>
    %263 = arith.mulf %262, %8 : vector<8x128xf32>
    %264 = math.tanh %263 : vector<8x128xf32>
    %265 = arith.mulf %264, %8 : vector<8x128xf32>
    %266 = arith.addf %265, %11 : vector<8x128xf32>
    %267 = vector.extract_strided_slice %266 {offsets = [0, 0], sizes = [8, 32], strides = [1, 1]} : vector<8x128xf32> to vector<8x32xf32>
    %268 = vector.extract_strided_slice %266 {offsets = [0, 32], sizes = [8, 32], strides = [1, 1]} : vector<8x128xf32> to vector<8x32xf32>
    %269 = vector.extract_strided_slice %266 {offsets = [0, 64], sizes = [8, 32], strides = [1, 1]} : vector<8x128xf32> to vector<8x32xf32>
    %270 = vector.extract_strided_slice %266 {offsets = [0, 96], sizes = [8, 32], strides = [1, 1]} : vector<8x128xf32> to vector<8x32xf32>
    %271 = arith.mulf %268, %237 : vector<8x32xf32>
    %272 = arith.mulf %267, %269 : vector<8x32xf32>
    %273 = arith.addf %271, %272 : vector<8x32xf32>
    %274 = math.tanh %273 : vector<8x32xf32>
    %275 = arith.mulf %270, %274 : vector<8x32xf32>
    %276 = arith.truncf %239 : vector<8x32xf32> to vector<8x32xbf16>
    %cst_49 = arith.constant dense<0.000000e+00> : vector<8x128xf32>
    %277 = tpu.matmul %276, %13, %cst_49 {dimension_numbers = #tpu.dot_dimension_numbers<[1], [0], [0], [1], [0, 0, 1, 1], [], []>} : vector<8x32xbf16>, vector<32x128xbf16>, vector<8x128xf32> -> vector<8x128xf32>
    %278 = arith.addf %277, %19 : vector<8x128xf32>
    %279 = arith.truncf %258 : vector<8x32xf32> to vector<8x32xbf16>
    %cst_50 = arith.constant dense<0.000000e+00> : vector<8x128xf32>
    %280 = tpu.matmul %279, %15, %cst_50 {dimension_numbers = #tpu.dot_dimension_numbers<[1], [0], [0], [1], [0, 0, 1, 1], [], []>} : vector<8x32xbf16>, vector<32x128xbf16>, vector<8x128xf32> -> vector<8x128xf32>
    %281 = arith.addf %278, %280 : vector<8x128xf32>
    %282 = arith.mulf %281, %8 : vector<8x128xf32>
    %283 = math.tanh %282 : vector<8x128xf32>
    %284 = arith.mulf %283, %8 : vector<8x128xf32>
    %285 = arith.addf %284, %11 : vector<8x128xf32>
    %286 = vector.extract_strided_slice %285 {offsets = [0, 0], sizes = [8, 32], strides = [1, 1]} : vector<8x128xf32> to vector<8x32xf32>
    %287 = vector.extract_strided_slice %285 {offsets = [0, 32], sizes = [8, 32], strides = [1, 1]} : vector<8x128xf32> to vector<8x32xf32>
    %288 = vector.extract_strided_slice %285 {offsets = [0, 64], sizes = [8, 32], strides = [1, 1]} : vector<8x128xf32> to vector<8x32xf32>
    %289 = vector.extract_strided_slice %285 {offsets = [0, 96], sizes = [8, 32], strides = [1, 1]} : vector<8x128xf32> to vector<8x32xf32>
    %290 = arith.mulf %287, %256 : vector<8x32xf32>
    %291 = arith.mulf %286, %288 : vector<8x32xf32>
    %292 = arith.addf %290, %291 : vector<8x32xf32>
    %293 = math.tanh %292 : vector<8x32xf32>
    %294 = arith.mulf %289, %293 : vector<8x32xf32>
    %295 = arith.truncf %275 : vector<8x32xf32> to vector<8x32xbf16>
    %cst_51 = arith.constant dense<0.000000e+00> : vector<8x128xf32>
    %296 = tpu.matmul %295, %13, %cst_51 {dimension_numbers = #tpu.dot_dimension_numbers<[1], [0], [0], [1], [0, 0, 1, 1], [], []>} : vector<8x32xbf16>, vector<32x128xbf16>, vector<8x128xf32> -> vector<8x128xf32>
    %297 = arith.addf %296, %19 : vector<8x128xf32>
    %298 = arith.truncf %294 : vector<8x32xf32> to vector<8x32xbf16>
    %cst_52 = arith.constant dense<0.000000e+00> : vector<8x128xf32>
    %299 = tpu.matmul %298, %15, %cst_52 {dimension_numbers = #tpu.dot_dimension_numbers<[1], [0], [0], [1], [0, 0, 1, 1], [], []>} : vector<8x32xbf16>, vector<32x128xbf16>, vector<8x128xf32> -> vector<8x128xf32>
    %300 = arith.addf %297, %299 : vector<8x128xf32>
    %301 = arith.mulf %300, %8 : vector<8x128xf32>
    %302 = math.tanh %301 : vector<8x128xf32>
    %303 = arith.mulf %302, %8 : vector<8x128xf32>
    %304 = arith.addf %303, %11 : vector<8x128xf32>
    %305 = vector.extract_strided_slice %304 {offsets = [0, 0], sizes = [8, 32], strides = [1, 1]} : vector<8x128xf32> to vector<8x32xf32>
    %306 = vector.extract_strided_slice %304 {offsets = [0, 32], sizes = [8, 32], strides = [1, 1]} : vector<8x128xf32> to vector<8x32xf32>
    %307 = vector.extract_strided_slice %304 {offsets = [0, 64], sizes = [8, 32], strides = [1, 1]} : vector<8x128xf32> to vector<8x32xf32>
    %308 = vector.extract_strided_slice %304 {offsets = [0, 96], sizes = [8, 32], strides = [1, 1]} : vector<8x128xf32> to vector<8x32xf32>
    %309 = arith.mulf %306, %292 : vector<8x32xf32>
    %310 = arith.mulf %305, %307 : vector<8x32xf32>
    %311 = arith.addf %309, %310 : vector<8x32xf32>
    %312 = math.tanh %311 : vector<8x32xf32>
    %313 = arith.mulf %308, %312 : vector<8x32xf32>
    %cst_53 = arith.constant 0.000000e+00 : f32
    %314 = vector.broadcast %cst_53 : f32 to vector<8x32xf32>
    %315 = arith.maximumf %313, %314 : vector<8x32xf32>
    %c0_54 = arith.constant 0 : index
    %c0_55 = arith.constant 0 : index
    %316 = vector.load %arg7[%c0_54, %c0_55] : memref<32x128xf32, #tpu.memory_space<vmem>>, vector<32x128xf32>
    %cst_56 = arith.constant dense<0.000000e+00> : vector<8x128xf32>
    %317 = tpu.matmul %315, %316, %cst_56 {dimension_numbers = #tpu.dot_dimension_numbers<[1], [0], [0], [1], [0, 0, 1, 1], [], []>} : vector<8x32xf32>, vector<32x128xf32>, vector<8x128xf32> -> vector<8x128xf32>
    %c0_57 = arith.constant 0 : index
    %c0_58 = arith.constant 0 : index
    %318 = vector.load %arg8[%c0_57, %c0_58] : memref<1x128xf32, #tpu.memory_space<vmem>>, vector<1x128xf32>
    %319 = vector.broadcast %318 : vector<1x128xf32> to vector<8x128xf32>
    %320 = arith.addf %317, %319 : vector<8x128xf32>
    %321 = arith.negf %320 : vector<8x128xf32>
    %322 = math.exp %321 : vector<8x128xf32>
    %cst_59 = arith.constant 1.000000e+00 : f32
    %323 = vector.broadcast %cst_59 : f32 to vector<8x128xf32>
    %324 = arith.addf %323, %322 : vector<8x128xf32>
    %325 = arith.divf %323, %324 : vector<8x128xf32>
    %c0_60 = arith.constant 0 : index
    %c0_61 = arith.constant 0 : index
    %326 = vector.load %arg9[%c0_60, %c0_61] : memref<8x128xf32, #tpu.memory_space<vmem>>, vector<8x128xf32>
    tpu.vector_store %arg9[%c0_60, %c0_61], %325 {strides = array<i32>} : memref<8x128xf32, #tpu.memory_space<vmem>>, vector<8x128xf32>,
    return
  }
}

</mosaic_0001>

<llo_original>
// kernel: lstm_forward.1
$region0: #{lstm_forward.1}
  #allocation0 [shape = 'u32[]', space=smem, size = 0x4, offset = 0x4, fixed_abs, tag = 'smem constant byte address 0x4 - core index']
  #allocation1 [shape = 'u32[144,128]{1,0:T(1,128)}', space=vmem, size = 0x12000, scoped, tag = 'internal scratch']
  #allocation2 [shape = 'f32[64,128]{1,0:T(8,128)}', space=vmem, size = 0x8000, scoped, tag = 'scratch operand']
  %s0 = inlined_call_operand.vmem [shape: bf16[64,8], index: 0, kind: input, shape index: {}]
  %s1 = inlined_call_operand.vmem [shape: bf16[8,128], index: 1, kind: input, shape index: {}]
  %s2 = inlined_call_operand.vmem [shape: bf16[32,128], index: 2, kind: input, shape index: {}]
  %s3 = inlined_call_operand.vmem [shape: f32[1,128], index: 3, kind: input, shape index: {}]
  %s4 = inlined_call_operand.vmem [shape: bf16[32,128], index: 4, kind: input, shape index: {}]
  %s5 = inlined_call_operand.vmem [shape: bf16[32,128], index: 5, kind: input, shape index: {}]
  %s6 = inlined_call_operand.vmem [shape: f32[1,128], index: 6, kind: input, shape index: {}]
  %s7 = inlined_call_operand.vmem [shape: f32[32,128], index: 7, kind: input, shape index: {}]
  %s8 = inlined_call_operand.vmem [shape: f32[1,128], index: 8, kind: input, shape index: {}]
  %s9 = inlined_call_operand.vmem [shape: f32[8,128], index: 9, kind: output, shape index: {}]
  %s10 = sld [smem:[#allocation0]]
  $region46: #{lstm_forward.1} parent=0
    _
  %s12 = ssub.s32 1, %s10
  %s13 = scalar_select 0, %s12, %s10
  // Predicated region
  $region2: #{lstm_forward.1} parent=0 // pred_check
    _
  $region3: #{lstm_forward.1} parent=0 // pred_check_branch
    %15 = sbr.rel (0) target = $region5
  $region4: #{lstm_forward.1} parent=0 // pred_region
    _
  $region5: #{lstm_forward.1} parent=0 // pred_fallthru
    _
  // Predicated region
  $region6: #{lstm_forward.1} parent=0 // pred_check
    _
  $region7: #{lstm_forward.1} parent=0 // pred_check_branch
    %17 = sbr.rel (0) target = $region9
  $region8: #{lstm_forward.1} parent=0 // pred_region
    _
  $region9: #{lstm_forward.1} parent=0 // pred_fallthru
    _
  // Predicated region
  $region10: #{lstm_forward.1} parent=0 // pred_check
    _
  $region11: #{lstm_forward.1} parent=0 // pred_check_branch
    %19 = sbr.rel (0) target = $region13
  $region12: #{lstm_forward.1} parent=0 // pred_region
    _
  $region13: #{lstm_forward.1} parent=0 // pred_fallthru
    _
  // Predicated region
  $region14: #{lstm_forward.1} parent=0 // pred_check
    _
  $region15: #{lstm_forward.1} parent=0 // pred_check_branch
    %21 = sbr.rel (0) target = $region17
  $region16: #{lstm_forward.1} parent=0 // pred_region
    _
  $region17: #{lstm_forward.1} parent=0 // pred_fallthru
    _
  // Predicated region
  $region18: #{lstm_forward.1} parent=0 // pred_check
    _
  $region19: #{lstm_forward.1} parent=0 // pred_check_branch
    %23 = sbr.rel (0) target = $region21
  $region20: #{lstm_forward.1} parent=0 // pred_region
    _
  $region21: #{lstm_forward.1} parent=0 // pred_fallthru
    _
  // Predicated region
  $region22: #{lstm_forward.1} parent=0 // pred_check
    _
  $region23: #{lstm_forward.1} parent=0 // pred_check_branch
    %25 = sbr.rel (0) target = $region25
  $region24: #{lstm_forward.1} parent=0 // pred_region
    _
  $region25: #{lstm_forward.1} parent=0 // pred_fallthru
    _
  // Predicated region
  $region26: #{lstm_forward.1} parent=0 // pred_check
    _
  $region27: #{lstm_forward.1} parent=0 // pred_check_branch
    %27 = sbr.rel (0) target = $region29
  $region28: #{lstm_forward.1} parent=0 // pred_region
    _
  $region29: #{lstm_forward.1} parent=0 // pred_fallthru
    _
  // Predicated region
  $region30: #{lstm_forward.1} parent=0 // pred_check
    _
  $region31: #{lstm_forward.1} parent=0 // pred_check_branch
    %29 = sbr.rel (0) target = $region33
  $region32: #{lstm_forward.1} parent=0 // pred_region
    _
  $region33: #{lstm_forward.1} parent=0 // pred_fallthru
    _
  // Predicated region
  $region34: #{lstm_forward.1} parent=0 // pred_check
    _
  $region35: #{lstm_forward.1} parent=0 // pred_check_branch
    %31 = sbr.rel (0) target = $region37
  $region36: #{lstm_forward.1} parent=0 // pred_region
    _
  $region37: #{lstm_forward.1} parent=0 // pred_fallthru
    _
  %v33 = vlaneseq
  %v34 = vand.u32 %v33, 127
  %vm35 = vcmp.ge.s32.totalorder %v34, 64
  %vm36 = vcmp.lt.s32.totalorder %v34, 96
  %vm37 = vmand %vm35, %vm36
  %v38 = vsel %vm37, 1.0, 0.5
  %v39 = vsel %vm37, 0.0, 0.5
  %v40 = vld [vmem:[%s1] sm:$0xf]
  %v41 = vld [vmem:[%s4] sm:$0xf]
  %v42 = vld [vmem:[%s4 + $0x4] sm:$0xf]
  %v43 = vld [vmem:[%s4 + $0x8] sm:$0xf]
  %v44 = vld [vmem:[%s4 + $0xc] sm:$0xf]
  %v45 = vld [vmem:[%s2] sm:$0xf]
  %v46 = vld [vmem:[%s2 + $0x4] sm:$0xf]
  %v47 = vld [vmem:[%s2 + $0x8] sm:$0xf]
  %v48 = vld [vmem:[%s2 + $0xc] sm:$0xf]
  %v49 = vld [vmem:[%s5] sm:$0xf]
  %v50 = vld [vmem:[%s5 + $0x4] sm:$0xf]
  %v51 = vld [vmem:[%s5 + $0x8] sm:$0xf]
  %v52 = vld [vmem:[%s5 + $0xc] sm:$0xf]
  %v53 = vld [vmem:[%s3] sm:$0x1]
  %v54 = vld [vmem:[%s6] sm:$0x1]
  %v56 = vlaneseq
  %v57 = vshrl.u32 %v56, 7
  %v58 = vsub.s32 0, %v57
  %v59 = vrot.slane %v54, %v58
  %v61 = vld [vmem:[%s0] sm:$0xf]
  %v62 = vld [vmem:[%s0 + $0x4] sm:$0xf]
  %v63 = vld [vmem:[%s0 + $0x8] sm:$0xf]
  %v64 = vld [vmem:[%s0 + $0xc] sm:$0xf]
  %v65 = vld [vmem:[%s0 + $0x10] sm:$0xf]
  %v66 = vld [vmem:[%s0 + $0x14] sm:$0xf]
  %v67 = vld [vmem:[%s0 + $0x18] sm:$0xf]
  %v68 = vld [vmem:[%s0 + $0x1c] sm:$0xf]
  %v70 = vlaneseq
  %v71 = vshrl.u32 %v70, 7
  %v72 = vsub.s32 0, %v71
  %v73 = vrot.slane %v53, %v72
  %v83 = vunpack.c.l.b16 %v61
  %v84 = vunpack.c.l.b16 %v62
  %v85 = vunpack.c.l.b16 %v63
  %v86 = vunpack.c.l.b16 %v64
  %v87 = vunpack.c.l.b16 %v65
  %v88 = vunpack.c.l.b16 %v66
  %v89 = vunpack.c.l.b16 %v67
  %v90 = vunpack.c.l.b16 %v68
  %v91 = vpack.c.b16 %v84, %v83
  %v92 = vpack.c.b16 %v86, %v85
  %v93 = vpack.c.b16 %v88, %v87
  %v94 = vpack.c.b16 %v90, %v89
  %vm95 = vcmask 64512
  %v97 = vsel %vm95, %v91, 0
  %v100 = vsel %vm95, %v92, 0
  %v103 = vsel %vm95, %v93, 0
  %v106 = vsel %vm95, %v94, 0
  %vm108 = vcmask 1043456
  %v110 = vsel %vm108, %v40, 0
  %112 = vmatprep.subr.bf16.mxu0 0
  %113 = vmatpush1.bf16.msra.mxu0 %v110
  %114 = vmatprep.subr.bf16.mxu0 0
  %115 = vmatpush1.bf16.msra.mxu0 0
  %116 = vmatprep.subr.bf16.mxu0 0
  %117 = vmatpush1.bf16.msra.mxu0 0
  %118 = vmatprep.subr.bf16.mxu0 0
  %119 = vmatpush1.bf16.msra.mxu0 0
  %120 = vmatprep.subr.bf16.mxu0 0
  %121 = vmatpush1.bf16.msra.mxu0 0
  %122 = vmatprep.subr.bf16.mxu0 0
  %123 = vmatpush1.bf16.msra.mxu0 0
  %124 = vmatprep.subr.bf16.mxu0 0
  %125 = vmatpush1.bf16.msra.mxu0 0
  %126 = vmatprep.subr.bf16.mxu0 0
  %127 = vmatpush1.bf16.msra.mxu0 0
  %128 = vmatprep.subr.bf16.mxu0 0
  %129 = vmatpush1.bf16.msra.mxu0 0
  %130 = vmatprep.subr.bf16.mxu0 0
  %131 = vmatpush1.bf16.msra.mxu0 0
  %132 = vmatprep.subr.bf16.mxu0 0
  %133 = vmatpush1.bf16.msra.mxu0 0
  %134 = vmatprep.subr.bf16.mxu0 0
  %135 = vmatpush1.bf16.msra.mxu0 0
  %136 = vmatprep.subr.bf16.mxu0 0
  %137 = vmatpush1.bf16.msra.mxu0 0
  %138 = vmatprep.subr.bf16.mxu0 0
  %139 = vmatpush1.bf16.msra.mxu0 0
  %140 = vmatprep.subr.bf16.mxu0 0
  %141 = vmatpush1.bf16.msra.mxu0 0
  %142 = vmatprep.subr.bf16.mxu0 0
  %143 = vmatpush1.bf16.msra.mxu0 0
  %144 = vmatprep.mubr.bf16.mxu0 0
  %145 = vmatmul.mubr.bf16.gmra.mrb[0].mxu0 %v97
  %v146 = vpop.f32.mrb[0].mxu0
  %v147 = vadd.f32 %v73, %v146
  %v148 = vpop.f32.mrb[0].mxu0
  %v149 = vpop.f32.mrb[0].mxu0
  %v150 = vadd.f32 %v73, %v149
  %v151 = vpop.f32.mrb[0].mxu0
  %152 = vmatprep.mubr.bf16.mxu0 0
  %153 = vmatmul.mubr.bf16.gmra.mrb[0].mxu0 %v100
  %v154 = vpop.f32.mrb[0].mxu0
  %v155 = vadd.f32 %v73, %v154
  %v156 = vpop.f32.mrb[0].mxu0
  %v157 = vpop.f32.mrb[0].mxu0
  %v158 = vadd.f32 %v73, %v157
  %v159 = vpop.f32.mrb[0].mxu0
  %160 = vmatprep.mubr.bf16.mxu0 0
  %161 = vmatmul.mubr.bf16.gmra.mrb[0].mxu0 %v103
  %v162 = vpop.f32.mrb[0].mxu0
  %v163 = vadd.f32 %v73, %v162
  %v164 = vpop.f32.mrb[0].mxu0
  %v165 = vpop.f32.mrb[0].mxu0
  %v166 = vadd.f32 %v73, %v165
  %v167 = vpop.f32.mrb[0].mxu0
  %168 = vmatprep.mubr.bf16.mxu0 0
  %169 = vmatmul.mubr.bf16.gmra.mrb[0].mxu0 %v106
  %v170 = vpop.f32.mrb[0].mxu0
  %v171 = vadd.f32 %v73, %v170
  %v172 = vpop.f32.mrb[0].mxu0
  %v173 = vpop.f32.mrb[0].mxu0
  %v174 = vadd.f32 %v73, %v173
  %v175 = vpop.f32.mrb[0].mxu0
  %176 = vdwg.mxu0
  %177 = vst [vmem:[#allocation2] sm:$0xff] %v147
  %178 = vst [vmem:[#allocation2 + $0x8] sm:$0xff] %v150
  %179 = vst [vmem:[#allocation2 + $0x10] sm:$0xff] %v155
  %180 = vst [vmem:[#allocation2 + $0x18] sm:$0xff] %v158
  %181 = vst [vmem:[#allocation2 + $0x20] sm:$0xff] %v163
  %182 = vst [vmem:[#allocation2 + $0x28] sm:$0xff] %v166
  %183 = vst [vmem:[#allocation2 + $0x30] sm:$0xff] %v171
  %184 = vst [vmem:[#allocation2 + $0x38] sm:$0xff] %v174
  %v185 = vld [vmem:[#allocation2] sm:$0xff]
  %v190 = vunpack.c.l.b16 %v45
  %v191 = vunpack.c.l.b16 %v46
  %v192 = vunpack.c.l.b16 %v47
  %v193 = vunpack.c.l.b16 %v48
  %v194 = vpack.c.b16 %v191, %v190
  %v195 = vpack.c.b16 %v193, %v192
  %vm198 = vcmask 261120
  %v200 = vsel %vm198, 0, 0
  %202 = vmatprep.subr.bf16.mxu0 0
  %203 = vmatpush1.bf16.msra.mxu0 %v194
  %204 = vmatprep.subr.bf16.mxu0 0
  %205 = vmatpush1.bf16.msra.mxu0 %v195
  %206 = vmatprep.subr.bf16.mxu0 0
  %207 = vmatpush1.bf16.msra.mxu0 0
  %208 = vmatprep.subr.bf16.mxu0 0
  %209 = vmatpush1.bf16.msra.mxu0 0
  %210 = vmatprep.subr.bf16.mxu0 0
  %211 = vmatpush1.bf16.msra.mxu0 0
  %212 = vmatprep.subr.bf16.mxu0 0
  %213 = vmatpush1.bf16.msra.mxu0 0
  %214 = vmatprep.subr.bf16.mxu0 0
  %215 = vmatpush1.bf16.msra.mxu0 0
  %216 = vmatprep.subr.bf16.mxu0 0
  %217 = vmatpush1.bf16.msra.mxu0 0
  %218 = vmatprep.subr.bf16.mxu0 0
  %219 = vmatpush1.bf16.msra.mxu0 0
  %220 = vmatprep.subr.bf16.mxu0 0
  %221 = vmatpush1.bf16.msra.mxu0 0
  %222 = vmatprep.subr.bf16.mxu0 0
  %223 = vmatpush1.bf16.msra.mxu0 0
  %224 = vmatprep.subr.bf16.mxu0 0
  %225 = vmatpush1.bf16.msra.mxu0 0
  %226 = vmatprep.subr.bf16.mxu0 0
  %227 = vmatpush1.bf16.msra.mxu0 0
  %228 = vmatprep.subr.bf16.mxu0 0
  %229 = vmatpush1.bf16.msra.mxu0 0
  %230 = vmatprep.subr.bf16.mxu0 0
  %231 = vmatpush1.bf16.msra.mxu0 0
  %232 = vmatprep.subr.bf16.mxu0 0
  %233 = vmatpush1.bf16.msra.mxu0 0
  %234 = vmatprep.mubr.bf16.mxu0 0
  %235 = vmatmul.mubr.bf16.gmra.mrb[0].mxu0 %v200
  %v236 = vpop.f32.mrb[0].mxu0
  %v237 = vadd.f32 0.0, %v236
  %v238 = vpop.f32.mrb[0].mxu0
  %v239 = vpop.f32.mrb[0].mxu0
  %v240 = vpop.f32.mrb[0].mxu0
  %241 = vdwg.mxu0
  %v242 = vadd.f32 %v185, %v237
  %v243 = vmul.f32 %v242, %v38
  %v244 = vtanh.pop %v243
  %v245 = vmul.f32 %v244, %v38
  %v246 = vadd.f32 %v245, %v39
  %v247 = vmul.f32 %v246, 0.0
  %249 = vrot.lane.b32.xlu0 %v246, 64
  %v250 = vpop.permute.xlu0 %249
  %v252 = vmul.f32 %v246, %v250
  %254 = vrot.lane.b32.xlu0 %v252, 32
  %v255 = vpop.permute.xlu0 %254
  %v257 = vadd.f32 %v247, %v255
  %v258 = vtanh.pop %v257
  %260 = vrot.lane.b32.xlu0 %v258, 64
  %v261 = vpop.permute.xlu0 %260
  %v263 = vmul.f32 %v246, %v261
  %v264 = vld [vmem:[#allocation2 + $0x8] sm:$0xff]
  %v265 = vpack.c.bf16 %v263, %v263
  %267 = vrot.lane.b32.xlu0 %v265, 32
  %v268 = vpop.permute.xlu0 %267
  %v270 = vsel %vm198, %v268, 0
  %272 = vmatprep.subr.bf16.mxu0 0
  %273 = vmatpush1.bf16.msra.mxu0 %v194
  %274 = vmatprep.subr.bf16.mxu0 0
  %275 = vmatpush1.bf16.msra.mxu0 %v195
  %276 = vmatprep.subr.bf16.mxu0 0
  %277 = vmatpush1.bf16.msra.mxu0 0
  %278 = vmatprep.subr.bf16.mxu0 0
  %279 = vmatpush1.bf16.msra.mxu0 0
  %280 = vmatprep.subr.bf16.mxu0 0
  %281 = vmatpush1.bf16.msra.mxu0 0
  %282 = vmatprep.subr.bf16.mxu0 0
  %283 = vmatpush1.bf16.msra.mxu0 0
  %284 = vmatprep.subr.bf16.mxu0 0
  %285 = vmatpush1.bf16.msra.mxu0 0
  %286 = vmatprep.subr.bf16.mxu0 0
  %287 = vmatpush1.bf16.msra.mxu0 0
  %288 = vmatprep.subr.bf16.mxu0 0
  %289 = vmatpush1.bf16.msra.mxu0 0
  %290 = vmatprep.subr.bf16.mxu0 0
  %291 = vmatpush1.bf16.msra.mxu0 0
  %292 = vmatprep.subr.bf16.mxu0 0
  %293 = vmatpush1.bf16.msra.mxu0 0
  %294 = vmatprep.subr.bf16.mxu0 0
  %295 = vmatpush1.bf16.msra.mxu0 0
  %296 = vmatprep.subr.bf16.mxu0 0
  %297 = vmatpush1.bf16.msra.mxu0 0
  %298 = vmatprep.subr.bf16.mxu0 0
  %299 = vmatpush1.bf16.msra.mxu0 0
  %300 = vmatprep.subr.bf16.mxu0 0
  %301 = vmatpush1.bf16.msra.mxu0 0
  %302 = vmatprep.subr.bf16.mxu0 0
  %303 = vmatpush1.bf16.msra.mxu0 0
  %304 = vmatprep.mubr.bf16.mxu0 0
  %305 = vmatmul.mubr.bf16.gmra.mrb[0].mxu0 %v270
  %v306 = vpop.f32.mrb[0].mxu0
  %v307 = vadd.f32 0.0, %v306
  %v308 = vpop.f32.mrb[0].mxu0
  %v309 = vpop.f32.mrb[0].mxu0
  %v310 = vpop.f32.mrb[0].mxu0
  %311 = vdwg.mxu0
  %v312 = vadd.f32 %v264, %v307
  %v313 = vmul.f32 %v312, %v38
  %v314 = vtanh.pop %v313
  %v315 = vmul.f32 %v314, %v38
  %v316 = vadd.f32 %v315, %v39
  %v317 = vmul.f32 %v316, %v257
  %319 = vrot.lane.b32.xlu0 %v316, 64
  %v320 = vpop.permute.xlu0 %319
  %v322 = vmul.f32 %v316, %v320
  %324 = vrot.lane.b32.xlu0 %v322, 32
  %v325 = vpop.permute.xlu0 %324
  %v327 = vadd.f32 %v317, %v325
  %v328 = vtanh.pop %v327
  %330 = vrot.lane.b32.xlu0 %v328, 64
  %v331 = vpop.permute.xlu0 %330
  %v333 = vmul.f32 %v316, %v331
  %v338 = vunpack.c.l.b16 %v41
  %v339 = vunpack.c.l.b16 %v42
  %v340 = vunpack.c.l.b16 %v43
  %v341 = vunpack.c.l.b16 %v44
  %v342 = vpack.c.b16 %v339, %v338
  %v343 = vpack.c.b16 %v341, %v340
  %346 = vmatprep.subr.bf16.mxu0 0
  %347 = vmatpush1.bf16.msra.mxu0 %v342
  %348 = vmatprep.subr.bf16.mxu0 0
  %349 = vmatpush1.bf16.msra.mxu0 %v343
  %350 = vmatprep.subr.bf16.mxu0 0
  %351 = vmatpush1.bf16.msra.mxu0 0
  %352 = vmatprep.subr.bf16.mxu0 0
  %353 = vmatpush1.bf16.msra.mxu0 0
  %354 = vmatprep.subr.bf16.mxu0 0
  %355 = vmatpush1.bf16.msra.mxu0 0
  %356 = vmatprep.subr.bf16.mxu0 0
  %357 = vmatpush1.bf16.msra.mxu0 0
  %358 = vmatprep.subr.bf16.mxu0 0
  %359 = vmatpush1.bf16.msra.mxu0 0
  %360 = vmatprep.subr.bf16.mxu0 0
  %361 = vmatpush1.bf16.msra.mxu0 0
  %362 = vmatprep.subr.bf16.mxu0 0
  %363 = vmatpush1.bf16.msra.mxu0 0
  %364 = vmatprep.subr.bf16.mxu0 0
  %365 = vmatpush1.bf16.msra.mxu0 0
  %366 = vmatprep.subr.bf16.mxu0 0
  %367 = vmatpush1.bf16.msra.mxu0 0
  %368 = vmatprep.subr.bf16.mxu0 0
  %369 = vmatpush1.bf16.msra.mxu0 0
  %370 = vmatprep.subr.bf16.mxu0 0
  %371 = vmatpush1.bf16.msra.mxu0 0
  %372 = vmatprep.subr.bf16.mxu0 0
  %373 = vmatpush1.bf16.msra.mxu0 0
  %374 = vmatprep.subr.bf16.mxu0 0
  %375 = vmatpush1.bf16.msra.mxu0 0
  %376 = vmatprep.subr.bf16.mxu0 0
  %377 = vmatpush1.bf16.msra.mxu0 0
  %378 = vmatprep.mubr.bf16.mxu0 0
  %379 = vmatmul.mubr.bf16.gmra.mrb[0].mxu0 %v270
  %v380 = vpop.f32.mrb[0].mxu0
  %v381 = vadd.f32 %v59, %v380
  %v382 = vpop.f32.mrb[0].mxu0
  %v383 = vpop.f32.mrb[0].mxu0
  %v384 = vpop.f32.mrb[0].mxu0
  %385 = vdwg.mxu0
  %v390 = vunpack.c.l.b16 %v49
  %v391 = vunpack.c.l.b16 %v50
  %v392 = vunpack.c.l.b16 %v51
  %v393 = vunpack.c.l.b16 %v52
  %v394 = vpack.c.b16 %v391, %v390
  %v395 = vpack.c.b16 %v393, %v392
  %398 = vmatprep.subr.bf16.mxu0 0
  %399 = vmatpush1.bf16.msra.mxu0 %v394
  %400 = vmatprep.subr.bf16.mxu0 0
  %401 = vmatpush1.bf16.msra.mxu0 %v395
  %402 = vmatprep.subr.bf16.mxu0 0
  %403 = vmatpush1.bf16.msra.mxu0 0
  %404 = vmatprep.subr.bf16.mxu0 0
  %405 = vmatpush1.bf16.msra.mxu0 0
  %406 = vmatprep.subr.bf16.mxu0 0
  %407 = vmatpush1.bf16.msra.mxu0 0
  %408 = vmatprep.subr.bf16.mxu0 0
  %409 = vmatpush1.bf16.msra.mxu0 0
  %410 = vmatprep.subr.bf16.mxu0 0
  %411 = vmatpush1.bf16.msra.mxu0 0
  %412 = vmatprep.subr.bf16.mxu0 0
  %413 = vmatpush1.bf16.msra.mxu0 0
  %414 = vmatprep.subr.bf16.mxu0 0
  %415 = vmatpush1.bf16.msra.mxu0 0
  %416 = vmatprep.subr.bf16.mxu0 0
  %417 = vmatpush1.bf16.msra.mxu0 0
  %418 = vmatprep.subr.bf16.mxu0 0
  %419 = vmatpush1.bf16.msra.mxu0 0
  %420 = vmatprep.subr.bf16.mxu0 0
  %421 = vmatpush1.bf16.msra.mxu0 0
  %422 = vmatprep.subr.bf16.mxu0 0
  %423 = vmatpush1.bf16.msra.mxu0 0
  %424 = vmatprep.subr.bf16.mxu0 0
  %425 = vmatpush1.bf16.msra.mxu0 0
  %426 = vmatprep.subr.bf16.mxu0 0
  %427 = vmatpush1.bf16.msra.mxu0 0
  %428 = vmatprep.subr.bf16.mxu0 0
  %429 = vmatpush1.bf16.msra.mxu0 0
  %430 = vmatprep.mubr.bf16.mxu0 0
  %431 = vmatmul.mubr.bf16.gmra.mrb[0].mxu0 %v200
  %v432 = vpop.f32.mrb[0].mxu0
  %v433 = vadd.f32 0.0, %v432
  %v434 = vpop.f32.mrb[0].mxu0
  %v435 = vpop.f32.mrb[0].mxu0
  %v436 = vpop.f32.mrb[0].mxu0
  %437 = vdwg.mxu0
  %v438 = vadd.f32 %v381, %v433
  %v439 = vmul.f32 %v438, %v38
  %v440 = vtanh.pop %v439
  %v441 = vmul.f32 %v440, %v38
  %v442 = vadd.f32 %v441, %v39
  %v443 = vmul.f32 %v442, 0.0
  %445 = vrot.lane.b32.xlu0 %v442, 64
  %v446 = vpop.permute.xlu0 %445
  %v448 = vmul.f32 %v442, %v446
  %450 = vrot.lane.b32.xlu0 %v448, 32
  %v451 = vpop.permute.xlu0 %450
  %v453 = vadd.f32 %v443, %v451
  %v454 = vtanh.pop %v453
  %456 = vrot.lane.b32.xlu0 %v454, 64
  %v457 = vpop.permute.xlu0 %456
  %v459 = vmul.f32 %v442, %v457
  %v460 = vld [vmem:[#allocation2 + $0x10] sm:$0xff]
  %v461 = vpack.c.bf16 %v333, %v333
  %463 = vrot.lane.b32.xlu0 %v461, 32
  %v464 = vpop.permute.xlu0 %463
  %v466 = vsel %vm198, %v464, 0
  %468 = vmatprep.subr.bf16.mxu0 0
  %469 = vmatpush1.bf16.msra.mxu0 %v194
  %470 = vmatprep.subr.bf16.mxu0 0
  %471 = vmatpush1.bf16.msra.mxu0 %v195
  %472 = vmatprep.subr.bf16.mxu0 0
  %473 = vmatpush1.bf16.msra.mxu0 0
  %474 = vmatprep.subr.bf16.mxu0 0
  %475 = vmatpush1.bf16.msra.mxu0 0
  %476 = vmatprep.subr.bf16.mxu0 0
  %477 = vmatpush1.bf16.msra.mxu0 0
  %478 = vmatprep.subr.bf16.mxu0 0
  %479 = vmatpush1.bf16.msra.mxu0 0
  %480 = vmatprep.subr.bf16.mxu0 0
  %481 = vmatpush1.bf16.msra.mxu0 0
  %482 = vmatprep.subr.bf16.mxu0 0
  %483 = vmatpush1.bf16.msra.mxu0 0
  %484 = vmatprep.subr.bf16.mxu0 0
  %485 = vmatpush1.bf16.msra.mxu0 0
  %486 = vmatprep.subr.bf16.mxu0 0
  %487 = vmatpush1.bf16.msra.mxu0 0
  %488 = vmatprep.subr.bf16.mxu0 0
  %489 = vmatpush1.bf16.msra.mxu0 0
  %490 = vmatprep.subr.bf16.mxu0 0
  %491 = vmatpush1.bf16.msra.mxu0 0
  %492 = vmatprep.subr.bf16.mxu0 0
  %493 = vmatpush1.bf16.msra.mxu0 0
  %494 = vmatprep.subr.bf16.mxu0 0
  %495 = vmatpush1.bf16.msra.mxu0 0
  %496 = vmatprep.subr.bf16.mxu0 0
  %497 = vmatpush1.bf16.msra.mxu0 0
  %498 = vmatprep.subr.bf16.mxu0 0
  %499 = vmatpush1.bf16.msra.mxu0 0
  %500 = vmatprep.mubr.bf16.mxu0 0
  %501 = vmatmul.mubr.bf16.gmra.mrb[0].mxu0 %v466
  %v502 = vpop.f32.mrb[0].mxu0
  %v503 = vadd.f32 0.0, %v502
  %v504 = vpop.f32.mrb[0].mxu0
  %v505 = vpop.f32.mrb[0].mxu0
  %v506 = vpop.f32.mrb[0].mxu0
  %507 = vdwg.mxu0
  %v508 = vadd.f32 %v460, %v503
  %v509 = vmul.f32 %v508, %v38
  %v510 = vtanh.pop %v509
  %v511 = vmul.f32 %v510, %v38
  %v512 = vadd.f32 %v511, %v39
  %v513 = vmul.f32 %v512, %v327
  %515 = vrot.lane.b32.xlu0 %v512, 64
  %v516 = vpop.permute.xlu0 %515
  %v518 = vmul.f32 %v512, %v516
  %520 = vrot.lane.b32.xlu0 %v518, 32
  %v521 = vpop.permute.xlu0 %520
  %v523 = vadd.f32 %v513, %v521
  %v524 = vtanh.pop %v523
  %526 = vrot.lane.b32.xlu0 %v524, 64
  %v527 = vpop.permute.xlu0 %526
  %v529 = vmul.f32 %v512, %v527
  %530 = vmatprep.subr.bf16.mxu0 0
  %531 = vmatpush1.bf16.msra.mxu0 %v342
  %532 = vmatprep.subr.bf16.mxu0 0
  %533 = vmatpush1.bf16.msra.mxu0 %v343
  %534 = vmatprep.subr.bf16.mxu0 0
  %535 = vmatpush1.bf16.msra.mxu0 0
  %536 = vmatprep.subr.bf16.mxu0 0
  %537 = vmatpush1.bf16.msra.mxu0 0
  %538 = vmatprep.subr.bf16.mxu0 0
  %539 = vmatpush1.bf16.msra.mxu0 0
  %540 = vmatprep.subr.bf16.mxu0 0
  %541 = vmatpush1.bf16.msra.mxu0 0
  %542 = vmatprep.subr.bf16.mxu0 0
  %543 = vmatpush1.bf16.msra.mxu0 0
  %544 = vmatprep.subr.bf16.mxu0 0
  %545 = vmatpush1.bf16.msra.mxu0 0
  %546 = vmatprep.subr.bf16.mxu0 0
  %547 = vmatpush1.bf16.msra.mxu0 0
  %548 = vmatprep.subr.bf16.mxu0 0
  %549 = vmatpush1.bf16.msra.mxu0 0
  %550 = vmatprep.subr.bf16.mxu0 0
  %551 = vmatpush1.bf16.msra.mxu0 0
  %552 = vmatprep.subr.bf16.mxu0 0
  %553 = vmatpush1.bf16.msra.mxu0 0
  %554 = vmatprep.subr.bf16.mxu0 0
  %555 = vmatpush1.bf16.msra.mxu0 0
  %556 = vmatprep.subr.bf16.mxu0 0
  %557 = vmatpush1.bf16.msra.mxu0 0
  %558 = vmatprep.subr.bf16.mxu0 0
  %559 = vmatpush1.bf16.msra.mxu0 0
  %560 = vmatprep.subr.bf16.mxu0 0
  %561 = vmatpush1.bf16.msra.mxu0 0
  %562 = vmatprep.mubr.bf16.mxu0 0
  %563 = vmatmul.mubr.bf16.gmra.mrb[0].mxu0 %v466
  %v564 = vpop.f32.mrb[0].mxu0
  %v565 = vadd.f32 %v59, %v564
  %v566 = vpop.f32.mrb[0].mxu0
  %v567 = vpop.f32.mrb[0].mxu0
  %v568 = vpop.f32.mrb[0].mxu0
  %569 = vdwg.mxu0
  %v570 = vpack.c.bf16 %v459, %v459
  %572 = vrot.lane.b32.xlu0 %v570, 32
  %v573 = vpop.permute.xlu0 %572
  %v575 = vsel %vm198, %v573, 0
  %577 = vmatprep.subr.bf16.mxu0 0
  %578 = vmatpush1.bf16.msra.mxu0 %v394
  %579 = vmatprep.subr.bf16.mxu0 0
  %580 = vmatpush1.bf16.msra.mxu0 %v395
  %581 = vmatprep.subr.bf16.mxu0 0
  %582 = vmatpush1.bf16.msra.mxu0 0
  %583 = vmatprep.subr.bf16.mxu0 0
  %584 = vmatpush1.bf16.msra.mxu0 0
  %585 = vmatprep.subr.bf16.mxu0 0
  %586 = vmatpush1.bf16.msra.mxu0 0
  %587 = vmatprep.subr.bf16.mxu0 0
  %588 = vmatpush1.bf16.msra.mxu0 0
  %589 = vmatprep.subr.bf16.mxu0 0
  %590 = vmatpush1.bf16.msra.mxu0 0
  %591 = vmatprep.subr.bf16.mxu0 0
  %592 = vmatpush1.bf16.msra.mxu0 0
  %593 = vmatprep.subr.bf16.mxu0 0
  %594 = vmatpush1.bf16.msra.mxu0 0
  %595 = vmatprep.subr.bf16.mxu0 0
  %596 = vmatpush1.bf16.msra.mxu0 0
  %597 = vmatprep.subr.bf16.mxu0 0
  %598 = vmatpush1.bf16.msra.mxu0 0
  %599 = vmatprep.subr.bf16.mxu0 0
  %600 = vmatpush1.bf16.msra.mxu0 0
  %601 = vmatprep.subr.bf16.mxu0 0
  %602 = vmatpush1.bf16.msra.mxu0 0
  %603 = vmatprep.subr.bf16.mxu0 0
  %604 = vmatpush1.bf16.msra.mxu0 0
  %605 = vmatprep.subr.bf16.mxu0 0
  %606 = vmatpush1.bf16.msra.mxu0 0
  %607 = vmatprep.subr.bf16.mxu0 0
  %608 = vmatpush1.bf16.msra.mxu0 0
  %609 = vmatprep.mubr.bf16.mxu0 0
  %610 = vmatmul.mubr.bf16.gmra.mrb[0].mxu0 %v575
  %v611 = vpop.f32.mrb[0].mxu0
  %v612 = vadd.f32 0.0, %v611
  %v613 = vpop.f32.mrb[0].mxu0
  %v614 = vpop.f32.mrb[0].mxu0
  %v615 = vpop.f32.mrb[0].mxu0
  %616 = vdwg.mxu0
  %v617 = vadd.f32 %v565, %v612
  %v618 = vmul.f32 %v617, %v38
  %v619 = vtanh.pop %v618
  %v620 = vmul.f32 %v619, %v38
  %v621 = vadd.f32 %v620, %v39
  %v622 = vmul.f32 %v621, %v453
  %624 = vrot.lane.b32.xlu0 %v621, 64
  %v625 = vpop.permute.xlu0 %624
  %v627 = vmul.f32 %v621, %v625
  %629 = vrot.lane.b32.xlu0 %v627, 32
  %v630 = vpop.permute.xlu0 %629
  %v632 = vadd.f32 %v622, %v630
  %v633 = vtanh.pop %v632
  %635 = vrot.lane.b32.xlu0 %v633, 64
  %v636 = vpop.permute.xlu0 %635
  %v638 = vmul.f32 %v621, %v636
  %v639 = vld [vmem:[#allocation2 + $0x18] sm:$0xff]
  %v640 = vpack.c.bf16 %v529, %v529
  %642 = vrot.lane.b32.xlu0 %v640, 32
  %v643 = vpop.permute.xlu0 %642
  %v645 = vsel %vm198, %v643, 0
  %647 = vmatprep.subr.bf16.mxu0 0
  %648 = vmatpush1.bf16.msra.mxu0 %v194
  %649 = vmatprep.subr.bf16.mxu0 0
  %650 = vmatpush1.bf16.msra.mxu0 %v195
  %651 = vmatprep.subr.bf16.mxu0 0
  %652 = vmatpush1.bf16.msra.mxu0 0
  %653 = vmatprep.subr.bf16.mxu0 0
  %654 = vmatpush1.bf16.msra.mxu0 0
  %655 = vmatprep.subr.bf16.mxu0 0
  %656 = vmatpush1.bf16.msra.mxu0 0
  %657 = vmatprep.subr.bf16.mxu0 0
  %658 = vmatpush1.bf16.msra.mxu0 0
  %659 = vmatprep.subr.bf16.mxu0 0
  %660 = vmatpush1.bf16.msra.mxu0 0
  %661 = vmatprep.subr.bf16.mxu0 0
  %662 = vmatpush1.bf16.msra.mxu0 0
  %663 = vmatprep.subr.bf16.mxu0 0
  %664 = vmatpush1.bf16.msra.mxu0 0
  %665 = vmatprep.subr.bf16.mxu0 0
  %666 = vmatpush1.bf16.msra.mxu0 0
  %667 = vmatprep.subr.bf16.mxu0 0
  %668 = vmatpush1.bf16.msra.mxu0 0
  %669 = vmatprep.subr.bf16.mxu0 0
  %670 = vmatpush1.bf16.msra.mxu0 0
  %671 = vmatprep.subr.bf16.mxu0 0
  %672 = vmatpush1.bf16.msra.mxu0 0
  %673 = vmatprep.subr.bf16.mxu0 0
  %674 = vmatpush1.bf16.msra.mxu0 0
  %675 = vmatprep.subr.bf16.mxu0 0
  %676 = vmatpush1.bf16.msra.mxu0 0
  %677 = vmatprep.subr.bf16.mxu0 0
  %678 = vmatpush1.bf16.msra.mxu0 0
  %679 = vmatprep.mubr.bf16.mxu0 0
  %680 = vmatmul.mubr.bf16.gmra.mrb[0].mxu0 %v645
  %v681 = vpop.f32.mrb[0].mxu0
  %v682 = vadd.f32 0.0, %v681
  %v683 = vpop.f32.mrb[0].mxu0
  %v684 = vpop.f32.mrb[0].mxu0
  %v685 = vpop.f32.mrb[0].mxu0
  %686 = vdwg.mxu0
  %v687 = vadd.f32 %v639, %v682
  %v688 = vmul.f32 %v687, %v38
  %v689 = vtanh.pop %v688
  %v690 = vmul.f32 %v689, %v38
  %v691 = vadd.f32 %v690, %v39
  %v692 = vmul.f32 %v691, %v523
  %694 = vrot.lane.b32.xlu0 %v691, 64
  %v695 = vpop.permute.xlu0 %694
  %v697 = vmul.f32 %v691, %v695
  %699 = vrot.lane.b32.xlu0 %v697, 32
  %v700 = vpop.permute.xlu0 %699
  %v702 = vadd.f32 %v692, %v700
  %v703 = vtanh.pop %v702
  %705 = vrot.lane.b32.xlu0 %v703, 64
  %v706 = vpop.permute.xlu0 %705
  %v708 = vmul.f32 %v691, %v706
  %709 = vmatprep.subr.bf16.mxu0 0
  %710 = vmatpush1.bf16.msra.mxu0 %v342
  %711 = vmatprep.subr.bf16.mxu0 0
  %712 = vmatpush1.bf16.msra.mxu0 %v343
  %713 = vmatprep.subr.bf16.mxu0 0
  %714 = vmatpush1.bf16.msra.mxu0 0
  %715 = vmatprep.subr.bf16.mxu0 0
  %716 = vmatpush1.bf16.msra.mxu0 0
  %717 = vmatprep.subr.bf16.mxu0 0
  %718 = vmatpush1.bf16.msra.mxu0 0
  %719 = vmatprep.subr.bf16.mxu0 0
  %720 = vmatpush1.bf16.msra.mxu0 0
  %721 = vmatprep.subr.bf16.mxu0 0
  %722 = vmatpush1.bf16.msra.mxu0 0
  %723 = vmatprep.subr.bf16.mxu0 0
  %724 = vmatpush1.bf16.msra.mxu0 0
  %725 = vmatprep.subr.bf16.mxu0 0
  %726 = vmatpush1.bf16.msra.mxu0 0
  %727 = vmatprep.subr.bf16.mxu0 0
  %728 = vmatpush1.bf16.msra.mxu0 0
  %729 = vmatprep.subr.bf16.mxu0 0
  %730 = vmatpush1.bf16.msra.mxu0 0
  %731 = vmatprep.subr.bf16.mxu0 0
  %732 = vmatpush1.bf16.msra.mxu0 0
  %733 = vmatprep.subr.bf16.mxu0 0
  %734 = vmatpush1.bf16.msra.mxu0 0
  %735 = vmatprep.subr.bf16.mxu0 0
  %736 = vmatpush1.bf16.msra.mxu0 0
  %737 = vmatprep.subr.bf16.mxu0 0
  %738 = vmatpush1.bf16.msra.mxu0 0
  %739 = vmatprep.subr.bf16.mxu0 0
  %740 = vmatpush1.bf16.msra.mxu0 0
  %741 = vmatprep.mubr.bf16.mxu0 0
  %742 = vmatmul.mubr.bf16.gmra.mrb[0].mxu0 %v645
  %v743 = vpop.f32.mrb[0].mxu0
  %v744 = vadd.f32 %v59, %v743
  %v745 = vpop.f32.mrb[0].mxu0
  %v746 = vpop.f32.mrb[0].mxu0
  %v747 = vpop.f32.mrb[0].mxu0
  %748 = vdwg.mxu0
  %v749 = vpack.c.bf16 %v638, %v638
  %751 = vrot.lane.b32.xlu0 %v749, 32
  %v752 = vpop.permute.xlu0 %751
  %v754 = vsel %vm198, %v752, 0
  %756 = vmatprep.subr.bf16.mxu0 0
  %757 = vmatpush1.bf16.msra.mxu0 %v394
  %758 = vmatprep.subr.bf16.mxu0 0
  %759 = vmatpush1.bf16.msra.mxu0 %v395
  %760 = vmatprep.subr.bf16.mxu0 0
  %761 = vmatpush1.bf16.msra.mxu0 0
  %762 = vmatprep.subr.bf16.mxu0 0
  %763 = vmatpush1.bf16.msra.mxu0 0
  %764 = vmatprep.subr.bf16.mxu0 0
  %765 = vmatpush1.bf16.msra.mxu0 0
  %766 = vmatprep.subr.bf16.mxu0 0
  %767 = vmatpush1.bf16.msra.mxu0 0
  %768 = vmatprep.subr.bf16.mxu0 0
  %769 = vmatpush1.bf16.msra.mxu0 0
  %770 = vmatprep.subr.bf16.mxu0 0
  %771 = vmatpush1.bf16.msra.mxu0 0
  %772 = vmatprep.subr.bf16.mxu0 0
  %773 = vmatpush1.bf16.msra.mxu0 0
  %774 = vmatprep.subr.bf16.mxu0 0
  %775 = vmatpush1.bf16.msra.mxu0 0
  %776 = vmatprep.subr.bf16.mxu0 0
  %777 = vmatpush1.bf16.msra.mxu0 0
  %778 = vmatprep.subr.bf16.mxu0 0
  %779 = vmatpush1.bf16.msra.mxu0 0
  %780 = vmatprep.subr.bf16.mxu0 0
  %781 = vmatpush1.bf16.msra.mxu0 0
  %782 = vmatprep.subr.bf16.mxu0 0
  %783 = vmatpush1.bf16.msra.mxu0 0
  %784 = vmatprep.subr.bf16.mxu0 0
  %785 = vmatpush1.bf16.msra.mxu0 0
  %786 = vmatprep.subr.bf16.mxu0 0
  %787 = vmatpush1.bf16.msra.mxu0 0
  %788 = vmatprep.mubr.bf16.mxu0 0
  %789 = vmatmul.mubr.bf16.gmra.mrb[0].mxu0 %v754
  %v790 = vpop.f32.mrb[0].mxu0
  %v791 = vadd.f32 0.0, %v790
  %v792 = vpop.f32.mrb[0].mxu0
  %v793 = vpop.f32.mrb[0].mxu0
  %v794 = vpop.f32.mrb[0].mxu0
  %795 = vdwg.mxu0
  %v796 = vadd.f32 %v744, %v791
  %v797 = vmul.f32 %v796, %v38
  %v798 = vtanh.pop %v797
  %v799 = vmul.f32 %v798, %v38
  %v800 = vadd.f32 %v799, %v39
  %v801 = vmul.f32 %v800, %v632
  %803 = vrot.lane.b32.xlu0 %v800, 64
  %v804 = vpop.permute.xlu0 %803
  %v806 = vmul.f32 %v800, %v804
  %808 = vrot.lane.b32.xlu0 %v806, 32
  %v809 = vpop.permute.xlu0 %808
  %v811 = vadd.f32 %v801, %v809
  %v812 = vtanh.pop %v811
  %814 = vrot.lane.b32.xlu0 %v812, 64
  %v815 = vpop.permute.xlu0 %814
  %v817 = vmul.f32 %v800, %v815
  %v818 = vld [vmem:[#allocation2 + $0x20] sm:$0xff]
  %v819 = vpack.c.bf16 %v708, %v708
  %821 = vrot.lane.b32.xlu0 %v819, 32
  %v822 = vpop.permute.xlu0 %821
  %v824 = vsel %vm198, %v822, 0
  %826 = vmatprep.subr.bf16.mxu0 0
  %827 = vmatpush1.bf16.msra.mxu0 %v194
  %828 = vmatprep.subr.bf16.mxu0 0
  %829 = vmatpush1.bf16.msra.mxu0 %v195
  %830 = vmatprep.subr.bf16.mxu0 0
  %831 = vmatpush1.bf16.msra.mxu0 0
  %832 = vmatprep.subr.bf16.mxu0 0
  %833 = vmatpush1.bf16.msra.mxu0 0
  %834 = vmatprep.subr.bf16.mxu0 0
  %835 = vmatpush1.bf16.msra.mxu0 0
  %836 = vmatprep.subr.bf16.mxu0 0
  %837 = vmatpush1.bf16.msra.mxu0 0
  %838 = vmatprep.subr.bf16.mxu0 0
  %839 = vmatpush1.bf16.msra.mxu0 0
  %840 = vmatprep.subr.bf16.mxu0 0
  %841 = vmatpush1.bf16.msra.mxu0 0
  %842 = vmatprep.subr.bf16.mxu0 0
  %843 = vmatpush1.bf16.msra.mxu0 0
  %844 = vmatprep.subr.bf16.mxu0 0
  %845 = vmatpush1.bf16.msra.mxu0 0
  %846 = vmatprep.subr.bf16.mxu0 0
  %847 = vmatpush1.bf16.msra.mxu0 0
  %848 = vmatprep.subr.bf16.mxu0 0
  %849 = vmatpush1.bf16.msra.mxu0 0
  %850 = vmatprep.subr.bf16.mxu0 0
  %851 = vmatpush1.bf16.msra.mxu0 0
  %852 = vmatprep.subr.bf16.mxu0 0
  %853 = vmatpush1.bf16.msra.mxu0 0
  %854 = vmatprep.subr.bf16.mxu0 0
  %855 = vmatpush1.bf16.msra.mxu0 0
  %856 = vmatprep.subr.bf16.mxu0 0
  %857 = vmatpush1.bf16.msra.mxu0 0
  %858 = vmatprep.mubr.bf16.mxu0 0
  %859 = vmatmul.mubr.bf16.gmra.mrb[0].mxu0 %v824
  %v860 = vpop.f32.mrb[0].mxu0
  %v861 = vadd.f32 0.0, %v860
  %v862 = vpop.f32.mrb[0].mxu0
  %v863 = vpop.f32.mrb[0].mxu0
  %v864 = vpop.f32.mrb[0].mxu0
  %865 = vdwg.mxu0
  %v866 = vadd.f32 %v818, %v861
  %v867 = vmul.f32 %v866, %v38
  %v868 = vtanh.pop %v867
  %v869 = vmul.f32 %v868, %v38
  %v870 = vadd.f32 %v869, %v39
  %v871 = vmul.f32 %v870, %v702
  %873 = vrot.lane.b32.xlu0 %v870, 64
  %v874 = vpop.permute.xlu0 %873
  %v876 = vmul.f32 %v870, %v874
  %878 = vrot.lane.b32.xlu0 %v876, 32
  %v879 = vpop.permute.xlu0 %878
  %v881 = vadd.f32 %v871, %v879
  %v882 = vtanh.pop %v881
  %884 = vrot.lane.b32.xlu0 %v882, 64
  %v885 = vpop.permute.xlu0 %884
  %v887 = vmul.f32 %v870, %v885
  %888 = vmatprep.subr.bf16.mxu0 0
  %889 = vmatpush1.bf16.msra.mxu0 %v342
  %890 = vmatprep.subr.bf16.mxu0 0
  %891 = vmatpush1.bf16.msra.mxu0 %v343
  %892 = vmatprep.subr.bf16.mxu0 0
  %893 = vmatpush1.bf16.msra.mxu0 0
  %894 = vmatprep.subr.bf16.mxu0 0
  %895 = vmatpush1.bf16.msra.mxu0 0
  %896 = vmatprep.subr.bf16.mxu0 0
  %897 = vmatpush1.bf16.msra.mxu0 0
  %898 = vmatprep.subr.bf16.mxu0 0
  %899 = vmatpush1.bf16.msra.mxu0 0
  %900 = vmatprep.subr.bf16.mxu0 0
  %901 = vmatpush1.bf16.msra.mxu0 0
  %902 = vmatprep.subr.bf16.mxu0 0
  %903 = vmatpush1.bf16.msra.mxu0 0
  %904 = vmatprep.subr.bf16.mxu0 0
  %905 = vmatpush1.bf16.msra.mxu0 0
  %906 = vmatprep.subr.bf16.mxu0 0
  %907 = vmatpush1.bf16.msra.mxu0 0
  %908 = vmatprep.subr.bf16.mxu0 0
  %909 = vmatpush1.bf16.msra.mxu0 0
  %910 = vmatprep.subr.bf16.mxu0 0
  %911 = vmatpush1.bf16.msra.mxu0 0
  %912 = vmatprep.subr.bf16.mxu0 0
  %913 = vmatpush1.bf16.msra.mxu0 0
  %914 = vmatprep.subr.bf16.mxu0 0
  %915 = vmatpush1.bf16.msra.mxu0 0
  %916 = vmatprep.subr.bf16.mxu0 0
  %917 = vmatpush1.bf16.msra.mxu0 0
  %918 = vmatprep.subr.bf16.mxu0 0
  %919 = vmatpush1.bf16.msra.mxu0 0
  %920 = vmatprep.mubr.bf16.mxu0 0
  %921 = vmatmul.mubr.bf16.gmra.mrb[0].mxu0 %v824
  %v922 = vpop.f32.mrb[0].mxu0
  %v923 = vadd.f32 %v59, %v922
  %v924 = vpop.f32.mrb[0].mxu0
  %v925 = vpop.f32.mrb[0].mxu0
  %v926 = vpop.f32.mrb[0].mxu0
  %927 = vdwg.mxu0
  %v928 = vpack.c.bf16 %v817, %v817
  %930 = vrot.lane.b32.xlu0 %v928, 32
  %v931 = vpop.permute.xlu0 %930
  %v933 = vsel %vm198, %v931, 0
  %935 = vmatprep.subr.bf16.mxu0 0
  %936 = vmatpush1.bf16.msra.mxu0 %v394
  %937 = vmatprep.subr.bf16.mxu0 0
  %938 = vmatpush1.bf16.msra.mxu0 %v395
  %939 = vmatprep.subr.bf16.mxu0 0
  %940 = vmatpush1.bf16.msra.mxu0 0
  %941 = vmatprep.subr.bf16.mxu0 0
  %942 = vmatpush1.bf16.msra.mxu0 0
  %943 = vmatprep.subr.bf16.mxu0 0
  %944 = vmatpush1.bf16.msra.mxu0 0
  %945 = vmatprep.subr.bf16.mxu0 0
  %946 = vmatpush1.bf16.msra.mxu0 0
  %947 = vmatprep.subr.bf16.mxu0 0
  %948 = vmatpush1.bf16.msra.mxu0 0
  %949 = vmatprep.subr.bf16.mxu0 0
  %950 = vmatpush1.bf16.msra.mxu0 0
  %951 = vmatprep.subr.bf16.mxu0 0
  %952 = vmatpush1.bf16.msra.mxu0 0
  %953 = vmatprep.subr.bf16.mxu0 0
  %954 = vmatpush1.bf16.msra.mxu0 0
  %955 = vmatprep.subr.bf16.mxu0 0
  %956 = vmatpush1.bf16.msra.mxu0 0
  %957 = vmatprep.subr.bf16.mxu0 0
  %958 = vmatpush1.bf16.msra.mxu0 0
  %959 = vmatprep.subr.bf16.mxu0 0
  %960 = vmatpush1.bf16.msra.mxu0 0
  %961 = vmatprep.subr.bf16.mxu0 0
  %962 = vmatpush1.bf16.msra.mxu0 0
  %963 = vmatprep.subr.bf16.mxu0 0
  %964 = vmatpush1.bf16.msra.mxu0 0
  %965 = vmatprep.subr.bf16.mxu0 0
  %966 = vmatpush1.bf16.msra.mxu0 0
  %967 = vmatprep.mubr.bf16.mxu0 0
  %968 = vmatmul.mubr.bf16.gmra.mrb[0].mxu0 %v933
  %v969 = vpop.f32.mrb[0].mxu0
  %v970 = vadd.f32 0.0, %v969
  %v971 = vpop.f32.mrb[0].mxu0
  %v972 = vpop.f32.mrb[0].mxu0
  %v973 = vpop.f32.mrb[0].mxu0
  %974 = vdwg.mxu0
  %v975 = vadd.f32 %v923, %v970
  %v976 = vmul.f32 %v975, %v38
  %v977 = vtanh.pop %v976
  %v978 = vmul.f32 %v977, %v38
  %v979 = vadd.f32 %v978, %v39
  %v980 = vmul.f32 %v979, %v811
  %982 = vrot.lane.b32.xlu0 %v979, 64
  %v983 = vpop.permute.xlu0 %982
  %v985 = vmul.f32 %v979, %v983
  %987 = vrot.lane.b32.xlu0 %v985, 32
  %v988 = vpop.permute.xlu0 %987
  %v990 = vadd.f32 %v980, %v988
  %v991 = vtanh.pop %v990
  %993 = vrot.lane.b32.xlu0 %v991, 64
  %v994 = vpop.permute.xlu0 %993
  %v996 = vmul.f32 %v979, %v994
  %v997 = vld [vmem:[#allocation2 + $0x28] sm:$0xff]
  %v998 = vpack.c.bf16 %v887, %v887
  %1000 = vrot.lane.b32.xlu0 %v998, 32
  %v1001 = vpop.permute.xlu0 %1000
  %v1003 = vsel %vm198, %v1001, 0
  %1005 = vmatprep.subr.bf16.mxu0 0
  %1006 = vmatpush1.bf16.msra.mxu0 %v194
  %1007 = vmatprep.subr.bf16.mxu0 0
  %1008 = vmatpush1.bf16.msra.mxu0 %v195
  %1009 = vmatprep.subr.bf16.mxu0 0
  %1010 = vmatpush1.bf16.msra.mxu0 0
  %1011 = vmatprep.subr.bf16.mxu0 0
  %1012 = vmatpush1.bf16.msra.mxu0 0
  %1013 = vmatprep.subr.bf16.mxu0 0
  %1014 = vmatpush1.bf16.msra.mxu0 0
  %1015 = vmatprep.subr.bf16.mxu0 0
  %1016 = vmatpush1.bf16.msra.mxu0 0
  %1017 = vmatprep.subr.bf16.mxu0 0
  %1018 = vmatpush1.bf16.msra.mxu0 0
  %1019 = vmatprep.subr.bf16.mxu0 0
  %1020 = vmatpush1.bf16.msra.mxu0 0
  %1021 = vmatprep.subr.bf16.mxu0 0
  %1022 = vmatpush1.bf16.msra.mxu0 0
  %1023 = vmatprep.subr.bf16.mxu0 0
  %1024 = vmatpush1.bf16.msra.mxu0 0
  %1025 = vmatprep.subr.bf16.mxu0 0
  %1026 = vmatpush1.bf16.msra.mxu0 0
  %1027 = vmatprep.subr.bf16.mxu0 0
  %1028 = vmatpush1.bf16.msra.mxu0 0
  %1029 = vmatprep.subr.bf16.mxu0 0
  %1030 = vmatpush1.bf16.msra.mxu0 0
  %1031 = vmatprep.subr.bf16.mxu0 0
  %1032 = vmatpush1.bf16.msra.mxu0 0
  %1033 = vmatprep.subr.bf16.mxu0 0
  %1034 = vmatpush1.bf16.msra.mxu0 0
  %1035 = vmatprep.subr.bf16.mxu0 0
  %1036 = vmatpush1.bf16.msra.mxu0 0
  %1037 = vmatprep.mubr.bf16.mxu0 0
  %1038 = vmatmul.mubr.bf16.gmra.mrb[0].mxu0 %v1003
  %v1039 = vpop.f32.mrb[0].mxu0
  %v1040 = vadd.f32 0.0, %v1039
  %v1041 = vpop.f32.mrb[0].mxu0
  %v1042 = vpop.f32.mrb[0].mxu0
  %v1043 = vpop.f32.mrb[0].mxu0
  %1044 = vdwg.mxu0
  %v1045 = vadd.f32 %v997, %v1040
  %v1046 = vmul.f32 %v1045, %v38
  %v1047 = vtanh.pop %v1046
  %v1048 = vmul.f32 %v1047, %v38
  %v1049 = vadd.f32 %v1048, %v39
  %v1050 = vmul.f32 %v1049, %v881
  %1052 = vrot.lane.b32.xlu0 %v1049, 64
  %v1053 = vpop.permute.xlu0 %1052
  %v1055 = vmul.f32 %v1049, %v1053
  %1057 = vrot.lane.b32.xlu0 %v1055, 32
  %v1058 = vpop.permute.xlu0 %1057
  %v1060 = vadd.f32 %v1050, %v1058
  %v1061 = vtanh.pop %v1060
  %1063 = vrot.lane.b32.xlu0 %v1061, 64
  %v1064 = vpop.permute.xlu0 %1063
  %v1066 = vmul.f32 %v1049, %v1064
  %1067 = vmatprep.subr.bf16.mxu0 0
  %1068 = vmatpush1.bf16.msra.mxu0 %v342
  %1069 = vmatprep.subr.bf16.mxu0 0
  %1070 = vmatpush1.bf16.msra.mxu0 %v343
  %1071 = vmatprep.subr.bf16.mxu0 0
  %1072 = vmatpush1.bf16.msra.mxu0 0
  %1073 = vmatprep.subr.bf16.mxu0 0
  %1074 = vmatpush1.bf16.msra.mxu0 0
  %1075 = vmatprep.subr.bf16.mxu0 0
  %1076 = vmatpush1.bf16.msra.mxu0 0
  %1077 = vmatprep.subr.bf16.mxu0 0
  %1078 = vmatpush1.bf16.msra.mxu0 0
  %1079 = vmatprep.subr.bf16.mxu0 0
  %1080 = vmatpush1.bf16.msra.mxu0 0
  %1081 = vmatprep.subr.bf16.mxu0 0
  %1082 = vmatpush1.bf16.msra.mxu0 0
  %1083 = vmatprep.subr.bf16.mxu0 0
  %1084 = vmatpush1.bf16.msra.mxu0 0
  %1085 = vmatprep.subr.bf16.mxu0 0
  %1086 = vmatpush1.bf16.msra.mxu0 0
  %1087 = vmatprep.subr.bf16.mxu0 0
  %1088 = vmatpush1.bf16.msra.mxu0 0
  %1089 = vmatprep.subr.bf16.mxu0 0
  %1090 = vmatpush1.bf16.msra.mxu0 0
  %1091 = vmatprep.subr.bf16.mxu0 0
  %1092 = vmatpush1.bf16.msra.mxu0 0
  %1093 = vmatprep.subr.bf16.mxu0 0
  %1094 = vmatpush1.bf16.msra.mxu0 0
  %1095 = vmatprep.subr.bf16.mxu0 0
  %1096 = vmatpush1.bf16.msra.mxu0 0
  %1097 = vmatprep.subr.bf16.mxu0 0
  %1098 = vmatpush1.bf16.msra.mxu0 0
  %1099 = vmatprep.mubr.bf16.mxu0 0
  %1100 = vmatmul.mubr.bf16.gmra.mrb[0].mxu0 %v1003
  %v1101 = vpop.f32.mrb[0].mxu0
  %v1102 = vadd.f32 %v59, %v1101
  %v1103 = vpop.f32.mrb[0].mxu0
  %v1104 = vpop.f32.mrb[0].mxu0
  %v1105 = vpop.f32.mrb[0].mxu0
  %1106 = vdwg.mxu0
  %v1107 = vpack.c.bf16 %v996, %v996
  %1109 = vrot.lane.b32.xlu0 %v1107, 32
  %v1110 = vpop.permute.xlu0 %1109
  %v1112 = vsel %vm198, %v1110, 0
  %1114 = vmatprep.subr.bf16.mxu0 0
  %1115 = vmatpush1.bf16.msra.mxu0 %v394
  %1116 = vmatprep.subr.bf16.mxu0 0
  %1117 = vmatpush1.bf16.msra.mxu0 %v395
  %1118 = vmatprep.subr.bf16.mxu0 0
  %1119 = vmatpush1.bf16.msra.mxu0 0
  %1120 = vmatprep.subr.bf16.mxu0 0
  %1121 = vmatpush1.bf16.msra.mxu0 0
  %1122 = vmatprep.subr.bf16.mxu0 0
  %1123 = vmatpush1.bf16.msra.mxu0 0
  %1124 = vmatprep.subr.bf16.mxu0 0
  %1125 = vmatpush1.bf16.msra.mxu0 0
  %1126 = vmatprep.subr.bf16.mxu0 0
  %1127 = vmatpush1.bf16.msra.mxu0 0
  %1128 = vmatprep.subr.bf16.mxu0 0
  %1129 = vmatpush1.bf16.msra.mxu0 0
  %1130 = vmatprep.subr.bf16.mxu0 0
  %1131 = vmatpush1.bf16.msra.mxu0 0
  %1132 = vmatprep.subr.bf16.mxu0 0
  %1133 = vmatpush1.bf16.msra.mxu0 0
  %1134 = vmatprep.subr.bf16.mxu0 0
  %1135 = vmatpush1.bf16.msra.mxu0 0
  %1136 = vmatprep.subr.bf16.mxu0 0
  %1137 = vmatpush1.bf16.msra.mxu0 0
  %1138 = vmatprep.subr.bf16.mxu0 0
  %1139 = vmatpush1.bf16.msra.mxu0 0
  %1140 = vmatprep.subr.bf16.mxu0 0
  %1141 = vmatpush1.bf16.msra.mxu0 0
  %1142 = vmatprep.subr.bf16.mxu0 0
  %1143 = vmatpush1.bf16.msra.mxu0 0
  %1144 = vmatprep.subr.bf16.mxu0 0
  %1145 = vmatpush1.bf16.msra.mxu0 0
  %1146 = vmatprep.mubr.bf16.mxu0 0
  %1147 = vmatmul.mubr.bf16.gmra.mrb[0].mxu0 %v1112
  %v1148 = vpop.f32.mrb[0].mxu0
  %v1149 = vadd.f32 0.0, %v1148
  %v1150 = vpop.f32.mrb[0].mxu0
  %v1151 = vpop.f32.mrb[0].mxu0
  %v1152 = vpop.f32.mrb[0].mxu0
  %1153 = vdwg.mxu0
  %v1154 = vadd.f32 %v1102, %v1149
  %v1155 = vmul.f32 %v1154, %v38
  %v1156 = vtanh.pop %v1155
  %v1157 = vmul.f32 %v1156, %v38
  %v1158 = vadd.f32 %v1157, %v39
  %v1159 = vmul.f32 %v1158, %v990
  %1161 = vrot.lane.b32.xlu0 %v1158, 64
  %v1162 = vpop.permute.xlu0 %1161
  %v1164 = vmul.f32 %v1158, %v1162
  %1166 = vrot.lane.b32.xlu0 %v1164, 32
  %v1167 = vpop.permute.xlu0 %1166
  %v1169 = vadd.f32 %v1159, %v1167
  %v1170 = vtanh.pop %v1169
  %1172 = vrot.lane.b32.xlu0 %v1170, 64
  %v1173 = vpop.permute.xlu0 %1172
  %v1175 = vmul.f32 %v1158, %v1173
  %v1176 = vld [vmem:[#allocation2 + $0x30] sm:$0xff]
  %v1177 = vpack.c.bf16 %v1066, %v1066
  %1179 = vrot.lane.b32.xlu0 %v1177, 32
  %v1180 = vpop.permute.xlu0 %1179
  %v1182 = vsel %vm198, %v1180, 0
  %1184 = vmatprep.subr.bf16.mxu0 0
  %1185 = vmatpush1.bf16.msra.mxu0 %v194
  %1186 = vmatprep.subr.bf16.mxu0 0
  %1187 = vmatpush1.bf16.msra.mxu0 %v195
  %1188 = vmatprep.subr.bf16.mxu0 0
  %1189 = vmatpush1.bf16.msra.mxu0 0
  %1190 = vmatprep.subr.bf16.mxu0 0
  %1191 = vmatpush1.bf16.msra.mxu0 0
  %1192 = vmatprep.subr.bf16.mxu0 0
  %1193 = vmatpush1.bf16.msra.mxu0 0
  %1194 = vmatprep.subr.bf16.mxu0 0
  %1195 = vmatpush1.bf16.msra.mxu0 0
  %1196 = vmatprep.subr.bf16.mxu0 0
  %1197 = vmatpush1.bf16.msra.mxu0 0
  %1198 = vmatprep.subr.bf16.mxu0 0
  %1199 = vmatpush1.bf16.msra.mxu0 0
  %1200 = vmatprep.subr.bf16.mxu0 0
  %1201 = vmatpush1.bf16.msra.mxu0 0
  %1202 = vmatprep.subr.bf16.mxu0 0
  %1203 = vmatpush1.bf16.msra.mxu0 0
  %1204 = vmatprep.subr.bf16.mxu0 0
  %1205 = vmatpush1.bf16.msra.mxu0 0
  %1206 = vmatprep.subr.bf16.mxu0 0
  %1207 = vmatpush1.bf16.msra.mxu0 0
  %1208 = vmatprep.subr.bf16.mxu0 0
  %1209 = vmatpush1.bf16.msra.mxu0 0
  %1210 = vmatprep.subr.bf16.mxu0 0
  %1211 = vmatpush1.bf16.msra.mxu0 0
  %1212 = vmatprep.subr.bf16.mxu0 0
  %1213 = vmatpush1.bf16.msra.mxu0 0
  %1214 = vmatprep.subr.bf16.mxu0 0
  %1215 = vmatpush1.bf16.msra.mxu0 0
  %1216 = vmatprep.mubr.bf16.mxu0 0
  %1217 = vmatmul.mubr.bf16.gmra.mrb[0].mxu0 %v1182
  %v1218 = vpop.f32.mrb[0].mxu0
  %v1219 = vadd.f32 0.0, %v1218
  %v1220 = vpop.f32.mrb[0].mxu0
  %v1221 = vpop.f32.mrb[0].mxu0
  %v1222 = vpop.f32.mrb[0].mxu0
  %1223 = vdwg.mxu0
  %v1224 = vadd.f32 %v1176, %v1219
  %v1225 = vmul.f32 %v1224, %v38
  %v1226 = vtanh.pop %v1225
  %v1227 = vmul.f32 %v1226, %v38
  %v1228 = vadd.f32 %v1227, %v39
  %v1229 = vmul.f32 %v1228, %v1060
  %1231 = vrot.lane.b32.xlu0 %v1228, 64
  %v1232 = vpop.permute.xlu0 %1231
  %v1234 = vmul.f32 %v1228, %v1232
  %1236 = vrot.lane.b32.xlu0 %v1234, 32
  %v1237 = vpop.permute.xlu0 %1236
  %v1239 = vadd.f32 %v1229, %v1237
  %v1240 = vtanh.pop %v1239
  %1242 = vrot.lane.b32.xlu0 %v1240, 64
  %v1243 = vpop.permute.xlu0 %1242
  %v1245 = vmul.f32 %v1228, %v1243
  %1246 = vmatprep.subr.bf16.mxu0 0
  %1247 = vmatpush1.bf16.msra.mxu0 %v342
  %1248 = vmatprep.subr.bf16.mxu0 0
  %1249 = vmatpush1.bf16.msra.mxu0 %v343
  %1250 = vmatprep.subr.bf16.mxu0 0
  %1251 = vmatpush1.bf16.msra.mxu0 0
  %1252 = vmatprep.subr.bf16.mxu0 0
  %1253 = vmatpush1.bf16.msra.mxu0 0
  %1254 = vmatprep.subr.bf16.mxu0 0
  %1255 = vmatpush1.bf16.msra.mxu0 0
  %1256 = vmatprep.subr.bf16.mxu0 0
  %1257 = vmatpush1.bf16.msra.mxu0 0
  %1258 = vmatprep.subr.bf16.mxu0 0
  %1259 = vmatpush1.bf16.msra.mxu0 0
  %1260 = vmatprep.subr.bf16.mxu0 0
  %1261 = vmatpush1.bf16.msra.mxu0 0
  %1262 = vmatprep.subr.bf16.mxu0 0
  %1263 = vmatpush1.bf16.msra.mxu0 0
  %1264 = vmatprep.subr.bf16.mxu0 0
  %1265 = vmatpush1.bf16.msra.mxu0 0
  %1266 = vmatprep.subr.bf16.mxu0 0
  %1267 = vmatpush1.bf16.msra.mxu0 0
  %1268 = vmatprep.subr.bf16.mxu0 0
  %1269 = vmatpush1.bf16.msra.mxu0 0
  %1270 = vmatprep.subr.bf16.mxu0 0
  %1271 = vmatpush1.bf16.msra.mxu0 0
  %1272 = vmatprep.subr.bf16.mxu0 0
  %1273 = vmatpush1.bf16.msra.mxu0 0
  %1274 = vmatprep.subr.bf16.mxu0 0
  %1275 = vmatpush1.bf16.msra.mxu0 0
  %1276 = vmatprep.subr.bf16.mxu0 0
  %1277 = vmatpush1.bf16.msra.mxu0 0
  %1278 = vmatprep.mubr.bf16.mxu0 0
  %1279 = vmatmul.mubr.bf16.gmra.mrb[0].mxu0 %v1182
  %v1280 = vpop.f32.mrb[0].mxu0
  %v1281 = vadd.f32 %v59, %v1280
  %v1282 = vpop.f32.mrb[0].mxu0
  %v1283 = vpop.f32.mrb[0].mxu0
  %v1284 = vpop.f32.mrb[0].mxu0
  %1285 = vdwg.mxu0
  %v1286 = vpack.c.bf16 %v1175, %v1175
  %1288 = vrot.lane.b32.xlu0 %v1286, 32
  %v1289 = vpop.permute.xlu0 %1288
  %v1291 = vsel %vm198, %v1289, 0
  %1293 = vmatprep.subr.bf16.mxu0 0
  %1294 = vmatpush1.bf16.msra.mxu0 %v394
  %1295 = vmatprep.subr.bf16.mxu0 0
  %1296 = vmatpush1.bf16.msra.mxu0 %v395
  %1297 = vmatprep.subr.bf16.mxu0 0
  %1298 = vmatpush1.bf16.msra.mxu0 0
  %1299 = vmatprep.subr.bf16.mxu0 0
  %1300 = vmatpush1.bf16.msra.mxu0 0
  %1301 = vmatprep.subr.bf16.mxu0 0
  %1302 = vmatpush1.bf16.msra.mxu0 0
  %1303 = vmatprep.subr.bf16.mxu0 0
  %1304 = vmatpush1.bf16.msra.mxu0 0
  %1305 = vmatprep.subr.bf16.mxu0 0
  %1306 = vmatpush1.bf16.msra.mxu0 0
  %1307 = vmatprep.subr.bf16.mxu0 0
  %1308 = vmatpush1.bf16.msra.mxu0 0
  %1309 = vmatprep.subr.bf16.mxu0 0
  %1310 = vmatpush1.bf16.msra.mxu0 0
  %1311 = vmatprep.subr.bf16.mxu0 0
  %1312 = vmatpush1.bf16.msra.mxu0 0
  %1313 = vmatprep.subr.bf16.mxu0 0
  %1314 = vmatpush1.bf16.msra.mxu0 0
  %1315 = vmatprep.subr.bf16.mxu0 0
  %1316 = vmatpush1.bf16.msra.mxu0 0
  %1317 = vmatprep.subr.bf16.mxu0 0
  %1318 = vmatpush1.bf16.msra.mxu0 0
  %1319 = vmatprep.subr.bf16.mxu0 0
  %1320 = vmatpush1.bf16.msra.mxu0 0
  %1321 = vmatprep.subr.bf16.mxu0 0
  %1322 = vmatpush1.bf16.msra.mxu0 0
  %1323 = vmatprep.subr.bf16.mxu0 0
  %1324 = vmatpush1.bf16.msra.mxu0 0
  %1325 = vmatprep.mubr.bf16.mxu0 0
  %1326 = vmatmul.mubr.bf16.gmra.mrb[0].mxu0 %v1291
  %v1327 = vpop.f32.mrb[0].mxu0
  %v1328 = vadd.f32 0.0, %v1327
  %v1329 = vpop.f32.mrb[0].mxu0
  %v1330 = vpop.f32.mrb[0].mxu0
  %v1331 = vpop.f32.mrb[0].mxu0
  %1332 = vdwg.mxu0
  %v1333 = vadd.f32 %v1281, %v1328
  %v1334 = vmul.f32 %v1333, %v38
  %v1335 = vtanh.pop %v1334
  %v1336 = vmul.f32 %v1335, %v38
  %v1337 = vadd.f32 %v1336, %v39
  %v1338 = vmul.f32 %v1337, %v1169
  %1340 = vrot.lane.b32.xlu0 %v1337, 64
  %v1341 = vpop.permute.xlu0 %1340
  %v1343 = vmul.f32 %v1337, %v1341
  %1345 = vrot.lane.b32.xlu0 %v1343, 32
  %v1346 = vpop.permute.xlu0 %1345
  %v1348 = vadd.f32 %v1338, %v1346
  %v1349 = vtanh.pop %v1348
  %1351 = vrot.lane.b32.xlu0 %v1349, 64
  %v1352 = vpop.permute.xlu0 %1351
  %v1354 = vmul.f32 %v1337, %v1352
  %v1355 = vld [vmem:[#allocation2 + $0x38] sm:$0xff]
  %v1356 = vpack.c.bf16 %v1245, %v1245
  %1358 = vrot.lane.b32.xlu0 %v1356, 32
  %v1359 = vpop.permute.xlu0 %1358
  %v1361 = vsel %vm198, %v1359, 0
  %1363 = vmatprep.subr.bf16.mxu0 0
  %1364 = vmatpush1.bf16.msra.mxu0 %v194
  %1365 = vmatprep.subr.bf16.mxu0 0
  %1366 = vmatpush1.bf16.msra.mxu0 %v195
  %1367 = vmatprep.subr.bf16.mxu0 0
  %1368 = vmatpush1.bf16.msra.mxu0 0
  %1369 = vmatprep.subr.bf16.mxu0 0
  %1370 = vmatpush1.bf16.msra.mxu0 0
  %1371 = vmatprep.subr.bf16.mxu0 0
  %1372 = vmatpush1.bf16.msra.mxu0 0
  %1373 = vmatprep.subr.bf16.mxu0 0
  %1374 = vmatpush1.bf16.msra.mxu0 0
  %1375 = vmatprep.subr.bf16.mxu0 0
  %1376 = vmatpush1.bf16.msra.mxu0 0
  %1377 = vmatprep.subr.bf16.mxu0 0
  %1378 = vmatpush1.bf16.msra.mxu0 0
  %1379 = vmatprep.subr.bf16.mxu0 0
  %1380 = vmatpush1.bf16.msra.mxu0 0
  %1381 = vmatprep.subr.bf16.mxu0 0
  %1382 = vmatpush1.bf16.msra.mxu0 0
  %1383 = vmatprep.subr.bf16.mxu0 0
  %1384 = vmatpush1.bf16.msra.mxu0 0
  %1385 = vmatprep.subr.bf16.mxu0 0
  %1386 = vmatpush1.bf16.msra.mxu0 0
  %1387 = vmatprep.subr.bf16.mxu0 0
  %1388 = vmatpush1.bf16.msra.mxu0 0
  %1389 = vmatprep.subr.bf16.mxu0 0
  %1390 = vmatpush1.bf16.msra.mxu0 0
  %1391 = vmatprep.subr.bf16.mxu0 0
  %1392 = vmatpush1.bf16.msra.mxu0 0
  %1393 = vmatprep.subr.bf16.mxu0 0
  %1394 = vmatpush1.bf16.msra.mxu0 0
  %1395 = vmatprep.mubr.bf16.mxu0 0
  %1396 = vmatmul.mubr.bf16.gmra.mrb[0].mxu0 %v1361
  %v1397 = vpop.f32.mrb[0].mxu0
  %v1398 = vadd.f32 0.0, %v1397
  %v1399 = vpop.f32.mrb[0].mxu0
  %v1400 = vpop.f32.mrb[0].mxu0
  %v1401 = vpop.f32.mrb[0].mxu0
  %1402 = vdwg.mxu0
  %v1403 = vadd.f32 %v1355, %v1398
  %v1404 = vmul.f32 %v1403, %v38
  %v1405 = vtanh.pop %v1404
  %v1406 = vmul.f32 %v1405, %v38
  %v1407 = vadd.f32 %v1406, %v39
  %v1408 = vmul.f32 %v1407, %v1239
  %1410 = vrot.lane.b32.xlu0 %v1407, 64
  %v1411 = vpop.permute.xlu0 %1410
  %v1413 = vmul.f32 %v1407, %v1411
  %1415 = vrot.lane.b32.xlu0 %v1413, 32
  %v1416 = vpop.permute.xlu0 %1415
  %v1418 = vadd.f32 %v1408, %v1416
  %v1419 = vtanh.pop %v1418
  %1421 = vrot.lane.b32.xlu0 %v1419, 64
  %v1422 = vpop.permute.xlu0 %1421
  %v1424 = vmul.f32 %v1407, %v1422
  %1425 = vmatprep.subr.bf16.mxu0 0
  %1426 = vmatpush1.bf16.msra.mxu0 %v342
  %1427 = vmatprep.subr.bf16.mxu0 0
  %1428 = vmatpush1.bf16.msra.mxu0 %v343
  %1429 = vmatprep.subr.bf16.mxu0 0
  %1430 = vmatpush1.bf16.msra.mxu0 0
  %1431 = vmatprep.subr.bf16.mxu0 0
  %1432 = vmatpush1.bf16.msra.mxu0 0
  %1433 = vmatprep.subr.bf16.mxu0 0
  %1434 = vmatpush1.bf16.msra.mxu0 0
  %1435 = vmatprep.subr.bf16.mxu0 0
  %1436 = vmatpush1.bf16.msra.mxu0 0
  %1437 = vmatprep.subr.bf16.mxu0 0
  %1438 = vmatpush1.bf16.msra.mxu0 0
  %1439 = vmatprep.subr.bf16.mxu0 0
  %1440 = vmatpush1.bf16.msra.mxu0 0
  %1441 = vmatprep.subr.bf16.mxu0 0
  %1442 = vmatpush1.bf16.msra.mxu0 0
  %1443 = vmatprep.subr.bf16.mxu0 0
  %1444 = vmatpush1.bf16.msra.mxu0 0
  %1445 = vmatprep.subr.bf16.mxu0 0
  %1446 = vmatpush1.bf16.msra.mxu0 0
  %1447 = vmatprep.subr.bf16.mxu0 0
  %1448 = vmatpush1.bf16.msra.mxu0 0
  %1449 = vmatprep.subr.bf16.mxu0 0
  %1450 = vmatpush1.bf16.msra.mxu0 0
  %1451 = vmatprep.subr.bf16.mxu0 0
  %1452 = vmatpush1.bf16.msra.mxu0 0
  %1453 = vmatprep.subr.bf16.mxu0 0
  %1454 = vmatpush1.bf16.msra.mxu0 0
  %1455 = vmatprep.subr.bf16.mxu0 0
  %1456 = vmatpush1.bf16.msra.mxu0 0
  %1457 = vmatprep.mubr.bf16.mxu0 0
  %1458 = vmatmul.mubr.bf16.gmra.mrb[0].mxu0 %v1361
  %v1459 = vpop.f32.mrb[0].mxu0
  %v1460 = vadd.f32 %v59, %v1459
  %v1461 = vpop.f32.mrb[0].mxu0
  %v1462 = vpop.f32.mrb[0].mxu0
  %v1463 = vpop.f32.mrb[0].mxu0
  %1464 = vdwg.mxu0
  %v1465 = vpack.c.bf16 %v1354, %v1354
  %1467 = vrot.lane.b32.xlu0 %v1465, 32
  %v1468 = vpop.permute.xlu0 %1467
  %v1470 = vsel %vm198, %v1468, 0
  %1472 = vmatprep.subr.bf16.mxu0 0
  %1473 = vmatpush1.bf16.msra.mxu0 %v394
  %1474 = vmatprep.subr.bf16.mxu0 0
  %1475 = vmatpush1.bf16.msra.mxu0 %v395
  %1476 = vmatprep.subr.bf16.mxu0 0
  %1477 = vmatpush1.bf16.msra.mxu0 0
  %1478 = vmatprep.subr.bf16.mxu0 0
  %1479 = vmatpush1.bf16.msra.mxu0 0
  %1480 = vmatprep.subr.bf16.mxu0 0
  %1481 = vmatpush1.bf16.msra.mxu0 0
  %1482 = vmatprep.subr.bf16.mxu0 0
  %1483 = vmatpush1.bf16.msra.mxu0 0
  %1484 = vmatprep.subr.bf16.mxu0 0
  %1485 = vmatpush1.bf16.msra.mxu0 0
  %1486 = vmatprep.subr.bf16.mxu0 0
  %1487 = vmatpush1.bf16.msra.mxu0 0
  %1488 = vmatprep.subr.bf16.mxu0 0
  %1489 = vmatpush1.bf16.msra.mxu0 0
  %1490 = vmatprep.subr.bf16.mxu0 0
  %1491 = vmatpush1.bf16.msra.mxu0 0
  %1492 = vmatprep.subr.bf16.mxu0 0
  %1493 = vmatpush1.bf16.msra.mxu0 0
  %1494 = vmatprep.subr.bf16.mxu0 0
  %1495 = vmatpush1.bf16.msra.mxu0 0
  %1496 = vmatprep.subr.bf16.mxu0 0
  %1497 = vmatpush1.bf16.msra.mxu0 0
  %1498 = vmatprep.subr.bf16.mxu0 0
  %1499 = vmatpush1.bf16.msra.mxu0 0
  %1500 = vmatprep.subr.bf16.mxu0 0
  %1501 = vmatpush1.bf16.msra.mxu0 0
  %1502 = vmatprep.subr.bf16.mxu0 0
  %1503 = vmatpush1.bf16.msra.mxu0 0
  %1504 = vmatprep.mubr.bf16.mxu0 0
  %1505 = vmatmul.mubr.bf16.gmra.mrb[0].mxu0 %v1470
  %v1506 = vpop.f32.mrb[0].mxu0
  %v1507 = vadd.f32 0.0, %v1506
  %v1508 = vpop.f32.mrb[0].mxu0
  %v1509 = vpop.f32.mrb[0].mxu0
  %v1510 = vpop.f32.mrb[0].mxu0
  %1511 = vdwg.mxu0
  %v1512 = vadd.f32 %v1460, %v1507
  %v1513 = vmul.f32 %v1512, %v38
  %v1514 = vtanh.pop %v1513
  %v1515 = vmul.f32 %v1514, %v38
  %v1516 = vadd.f32 %v1515, %v39
  %v1517 = vmul.f32 %v1516, %v1348
  %1519 = vrot.lane.b32.xlu0 %v1516, 64
  %v1520 = vpop.permute.xlu0 %1519
  %v1522 = vmul.f32 %v1516, %v1520
  %1524 = vrot.lane.b32.xlu0 %v1522, 32
  %v1525 = vpop.permute.xlu0 %1524
  %v1527 = vadd.f32 %v1517, %v1525
  %v1528 = vtanh.pop %v1527
  %1530 = vrot.lane.b32.xlu0 %v1528, 64
  %v1531 = vpop.permute.xlu0 %1530
  %v1533 = vmul.f32 %v1516, %v1531
  %v1534 = vpack.c.bf16 %v1424, %v1424
  %1536 = vrot.lane.b32.xlu0 %v1534, 32
  %v1537 = vpop.permute.xlu0 %1536
  %v1539 = vsel %vm198, %v1537, 0
  %1541 = vmatprep.subr.bf16.mxu0 0
  %1542 = vmatpush1.bf16.msra.mxu0 %v342
  %1543 = vmatprep.subr.bf16.mxu0 0
  %1544 = vmatpush1.bf16.msra.mxu0 %v343
  %1545 = vmatprep.subr.bf16.mxu0 0
  %1546 = vmatpush1.bf16.msra.mxu0 0
  %1547 = vmatprep.subr.bf16.mxu0 0
  %1548 = vmatpush1.bf16.msra.mxu0 0
  %1549 = vmatprep.subr.bf16.mxu0 0
  %1550 = vmatpush1.bf16.msra.mxu0 0
  %1551 = vmatprep.subr.bf16.mxu0 0
  %1552 = vmatpush1.bf16.msra.mxu0 0
  %1553 = vmatprep.subr.bf16.mxu0 0
  %1554 = vmatpush1.bf16.msra.mxu0 0
  %1555 = vmatprep.subr.bf16.mxu0 0
  %1556 = vmatpush1.bf16.msra.mxu0 0
  %1557 = vmatprep.subr.bf16.mxu0 0
  %1558 = vmatpush1.bf16.msra.mxu0 0
  %1559 = vmatprep.subr.bf16.mxu0 0
  %1560 = vmatpush1.bf16.msra.mxu0 0
  %1561 = vmatprep.subr.bf16.mxu0 0
  %1562 = vmatpush1.bf16.msra.mxu0 0
  %1563 = vmatprep.subr.bf16.mxu0 0
  %1564 = vmatpush1.bf16.msra.mxu0 0
  %1565 = vmatprep.subr.bf16.mxu0 0
  %1566 = vmatpush1.bf16.msra.mxu0 0
  %1567 = vmatprep.subr.bf16.mxu0 0
  %1568 = vmatpush1.bf16.msra.mxu0 0
  %1569 = vmatprep.subr.bf16.mxu0 0
  %1570 = vmatpush1.bf16.msra.mxu0 0
  %1571 = vmatprep.subr.bf16.mxu0 0
  %1572 = vmatpush1.bf16.msra.mxu0 0
  %1573 = vmatprep.mubr.bf16.mxu0 0
  %1574 = vmatmul.mubr.bf16.gmra.mrb[0].mxu0 %v1539
  %v1575 = vpop.f32.mrb[0].mxu0
  %v1576 = vadd.f32 %v59, %v1575
  %v1577 = vpop.f32.mrb[0].mxu0
  %v1578 = vpop.f32.mrb[0].mxu0
  %v1579 = vpop.f32.mrb[0].mxu0
  %1580 = vdwg.mxu0
  %v1581 = vpack.c.bf16 %v1533, %v1533
  %1583 = vrot.lane.b32.xlu0 %v1581, 32
  %v1584 = vpop.permute.xlu0 %1583
  %v1586 = vsel %vm198, %v1584, 0
  %1588 = vmatprep.subr.bf16.mxu0 0
  %1589 = vmatpush1.bf16.msra.mxu0 %v394
  %1590 = vmatprep.subr.bf16.mxu0 0
  %1591 = vmatpush1.bf16.msra.mxu0 %v395
  %1592 = vmatprep.subr.bf16.mxu0 0
  %1593 = vmatpush1.bf16.msra.mxu0 0
  %1594 = vmatprep.subr.bf16.mxu0 0
  %1595 = vmatpush1.bf16.msra.mxu0 0
  %1596 = vmatprep.subr.bf16.mxu0 0
  %1597 = vmatpush1.bf16.msra.mxu0 0
  %1598 = vmatprep.subr.bf16.mxu0 0
  %1599 = vmatpush1.bf16.msra.mxu0 0
  %1600 = vmatprep.subr.bf16.mxu0 0
  %1601 = vmatpush1.bf16.msra.mxu0 0
  %1602 = vmatprep.subr.bf16.mxu0 0
  %1603 = vmatpush1.bf16.msra.mxu0 0
  %1604 = vmatprep.subr.bf16.mxu0 0
  %1605 = vmatpush1.bf16.msra.mxu0 0
  %1606 = vmatprep.subr.bf16.mxu0 0
  %1607 = vmatpush1.bf16.msra.mxu0 0
  %1608 = vmatprep.subr.bf16.mxu0 0
  %1609 = vmatpush1.bf16.msra.mxu0 0
  %1610 = vmatprep.subr.bf16.mxu0 0
  %1611 = vmatpush1.bf16.msra.mxu0 0
  %1612 = vmatprep.subr.bf16.mxu0 0
  %1613 = vmatpush1.bf16.msra.mxu0 0
  %1614 = vmatprep.subr.bf16.mxu0 0
  %1615 = vmatpush1.bf16.msra.mxu0 0
  %1616 = vmatprep.subr.bf16.mxu0 0
  %1617 = vmatpush1.bf16.msra.mxu0 0
  %1618 = vmatprep.subr.bf16.mxu0 0
  %1619 = vmatpush1.bf16.msra.mxu0 0
  %1620 = vmatprep.mubr.bf16.mxu0 0
  %1621 = vmatmul.mubr.bf16.gmra.mrb[0].mxu0 %v1586
  %v1622 = vpop.f32.mrb[0].mxu0
  %v1623 = vadd.f32 0.0, %v1622
  %v1624 = vpop.f32.mrb[0].mxu0
  %v1625 = vpop.f32.mrb[0].mxu0
  %v1626 = vpop.f32.mrb[0].mxu0
  %1627 = vdwg.mxu0
  %v1628 = vadd.f32 %v1576, %v1623
  %v1629 = vmul.f32 %v1628, %v38
  %v1630 = vtanh.pop %v1629
  %v1631 = vmul.f32 %v1630, %v38
  %v1632 = vadd.f32 %v1631, %v39
  %v1633 = vmul.f32 %v1632, %v1527
  %1635 = vrot.lane.b32.xlu0 %v1632, 64
  %v1636 = vpop.permute.xlu0 %1635
  %v1638 = vmul.f32 %v1632, %v1636
  %1640 = vrot.lane.b32.xlu0 %v1638, 32
  %v1641 = vpop.permute.xlu0 %1640
  %v1643 = vadd.f32 %v1633, %v1641
  %v1644 = vtanh.pop %v1643
  %1646 = vrot.lane.b32.xlu0 %v1644, 64
  %v1647 = vpop.permute.xlu0 %1646
  %v1649 = vmul.f32 %v1632, %v1647
  %v1650 = vmax.f32 %v1649, 0.0
  %v1651 = vld [vmem:[%s7] sm:$0xff]
  %v1652 = vld [vmem:[%s7 + $0x8] sm:$0xff]
  %v1653 = vld [vmem:[%s7 + $0x10] sm:$0xff]
  %v1654 = vld [vmem:[%s7 + $0x18] sm:$0xff]
  %v1655 = vld [vmem:[%s8] sm:$0x1]
  %v1657 = vlaneseq
  %v1658 = vshrl.u32 %v1657, 7
  %v1659 = vsub.s32 0, %v1658
  %v1660 = vrot.slane %v1655, %v1659
  %1663 = vrot.lane.b32.xlu0 %v1650, 32
  %v1664 = vpop.permute.xlu0 %1663
  %v1665 = vsel %vm198, %v1664, 0
  %1667 = vmatprep.subr.mxu0 0.0
  %1668 = vmatpush1.msra.mxu0 %v1651
  %1669 = vmatprep.subr.mxu0 0.0
  %1670 = vmatpush1.msra.mxu0 %v1652
  %1671 = vmatprep.subr.mxu0 0.0
  %1672 = vmatpush1.msra.mxu0 %v1653
  %1673 = vmatprep.subr.mxu0 0.0
  %1674 = vmatpush1.msra.mxu0 %v1654
  %1675 = vmatprep.subr.mxu0 0.0
  %1676 = vmatpush1.msra.mxu0 0.0
  %1677 = vmatprep.subr.mxu0 0.0
  %1678 = vmatpush1.msra.mxu0 0.0
  %1679 = vmatprep.subr.mxu0 0.0
  %1680 = vmatpush1.msra.mxu0 0.0
  %1681 = vmatprep.subr.mxu0 0.0
  %1682 = vmatpush1.msra.mxu0 0.0
  %1683 = vmatprep.subr.mxu0 0.0
  %1684 = vmatpush1.msra.mxu0 0.0
  %1685 = vmatprep.subr.mxu0 0.0
  %1686 = vmatpush1.msra.mxu0 0.0
  %1687 = vmatprep.subr.mxu0 0.0
  %1688 = vmatpush1.msra.mxu0 0.0
  %1689 = vmatprep.subr.mxu0 0.0
  %1690 = vmatpush1.msra.mxu0 0.0
  %1691 = vmatprep.subr.mxu0 0.0
  %1692 = vmatpush1.msra.mxu0 0.0
  %1693 = vmatprep.subr.mxu0 0.0
  %1694 = vmatpush1.msra.mxu0 0.0
  %1695 = vmatprep.subr.mxu0 0.0
  %1696 = vmatpush1.msra.mxu0 0.0
  %1697 = vmatprep.subr.mxu0 0.0
  %1698 = vmatpush1.msra.mxu0 0.0
  %1699 = vmatprep.subr.mxu0 0.0
  %1700 = vmatpush1.msra.mxu0 0.0
  %1701 = vmatprep.subr.mxu0 0.0
  %1702 = vmatpush1.msra.mxu0 0.0
  %1703 = vmatprep.subr.mxu0 0.0
  %1704 = vmatpush1.msra.mxu0 0.0
  %1705 = vmatprep.subr.mxu0 0.0
  %1706 = vmatpush1.msra.mxu0 0.0
  %1707 = vmatprep.subr.mxu0 0.0
  %1708 = vmatpush1.msra.mxu0 0.0
  %1709 = vmatprep.subr.mxu0 0.0
  %1710 = vmatpush1.msra.mxu0 0.0
  %1711 = vmatprep.subr.mxu0 0.0
  %1712 = vmatpush1.msra.mxu0 0.0
  %1713 = vmatprep.subr.mxu0 0.0
  %1714 = vmatpush1.msra.mxu0 0.0
  %1715 = vmatprep.subr.mxu0 0.0
  %1716 = vmatpush1.msra.mxu0 0.0
  %1717 = vmatprep.subr.mxu0 0.0
  %1718 = vmatpush1.msra.mxu0 0.0
  %1719 = vmatprep.subr.mxu0 0.0
  %1720 = vmatpush1.msra.mxu0 0.0
  %1721 = vmatprep.subr.mxu0 0.0
  %1722 = vmatpush1.msra.mxu0 0.0
  %1723 = vmatprep.subr.mxu0 0.0
  %1724 = vmatpush1.msra.mxu0 0.0
  %1725 = vmatprep.subr.mxu0 0.0
  %1726 = vmatpush1.msra.mxu0 0.0
  %1727 = vmatprep.subr.mxu0 0.0
  %1728 = vmatpush1.msra.mxu0 0.0
  %1729 = vmatprep.subr.mxu0 0.0
  %1730 = vmatpush1.msra.mxu0 0.0
  %1731 = vmatprep.mubr.f32.mxu0 0.0
  %1732 = vmatmul.mubr.f32.gmra.mrb[0].mxu0 %v1665
  %v1733 = vpop.f32.mrb[0].mxu0
  %v1734 = vadd.f32 %v1660, %v1733
  %v1735 = vpop.f32.mrb[0].mxu0
  %1736 = vdwg.mxu0
  %v1737 = vxor.u32 %v1734, 2147483648
  %v1738 = vmul.f32 %v1737, 1.442695
  %v1739 = vpow.pop %v1738
  %v1740 = vadd.f32 %v1739, 1.0
  %v1741 = vrcp.pop %v1740
  %v1742 = vmul.f32 1.0, %v1741
  %1743 = vst [vmem:[%s9] sm:$0xff] %v1742
  // Predicated region
  $region38: #{lstm_forward.1} parent=0 // pred_check
    _
  $region39: #{lstm_forward.1} parent=0 // pred_check_branch
    %1745 = sbr.rel (0) target = $region41
  $region40: #{lstm_forward.1} parent=0 // pred_region
    _
  $region41: #{lstm_forward.1} parent=0 // pred_fallthru
    _
  // Predicated region
  $region42: #{lstm_forward.1} parent=0 // pred_check
    _
  $region43: #{lstm_forward.1} parent=0 // pred_check_branch
    %1747 = sbr.rel (0) target = $region45
  $region44: #{lstm_forward.1} parent=0 // pred_region
    _
  $region45: #{lstm_forward.1} parent=0 // pred_fallthru
    _

</llo_original>
